<compile_context>
chip_gen: v7x
topology: tpu7x:2x2x1
jax: 0.10.0
libtpu: 0.0.40
codegen_flags: <defaults>
</compile_context>

<pallas_src>
import functools
import math

import jax
import jax.numpy as jnp
from jax.experimental import pallas as pl
from jax.experimental.pallas import tpu as pltpu


# -----------------------------------------------------------------------------
# Pallas kernel: one grid step == TB batch elements, fully fused in VMEM.
# -----------------------------------------------------------------------------
def _graph_res_block_kernel(
    x_ref,     # (TB, V, C)       f32
    adjb_ref,  # (TB*V, TB*V)     bf16  -- block-diagonal adjacency kron(I_TB, A)
    w1t_ref,   # (C, H)           bf16  -- lin1 weight pre-transposed (W1 is (H, C))
    wg_ref,    # (H, H)           bf16  -- graph-conv weight
    w2t_ref,   # (H, C)           bf16  -- lin2 weight pre-transposed (W2 is (C, H))
    pp_ref,    # (R, P)           f32   -- packed small params (layout set by wrapper)
    o_ref,     # (TB, V, C)       f32
    *,
    eps, tb, v, c, h,
):
    f32 = jnp.float32
    bf16 = jnp.bfloat16
    m = tb * v

    # Unpack the small parameters (static row / lane slices of one VMEM tile).
    pp = pp_ref[...]
    lnp_w, lnp_b = pp[0:1, :c], pp[1:2, :c]
    b1, ln1_w, ln1_b = pp[2:3, :h], pp[3:4, :h], pp[4:5, :h]
    bg, ln2_w, ln2_b = pp[5:6, :h], pp[6:7, :h], pp[7:8, :h]
    b2 = pp[8:9, :c]

    def layer_norm(val, w, b):
        # BertLayerNorm: biased variance, eps inside the sqrt; rsqrt -> EUP slot.
        u = jnp.mean(val, axis=-1, keepdims=True)
        d = val - u
        s = jnp.mean(d * d, axis=-1, keepdims=True)
        return w * (d * jax.lax.rsqrt(s + eps)) + b

    # Flatten the batch tile into the matmul M dimension. V % 8 == 0, so this
    # (TB, V, C) -> (TB*V, C) collapse is a pure vreg re-labeling.
    x2 = x_ref[...].reshape(m, c)

    # pre_norm + relu (f32 elementwise).
    y = jnp.maximum(layer_norm(x2, lnp_w, lnp_b), 0.0)

    # lin1: C -> H  (bf16 operands, f32 accumulation on the MXU).
    y = jnp.dot(y.astype(bf16), w1t_ref[...], preferred_element_type=f32) + b1

    # norm1 + relu.
    y = jnp.maximum(layer_norm(y, ln1_w, ln1_b), 0.0)

    # Graph convolution on the flat layout: one (M, M) @ (M, H) MXU matmul
    # against the block-diagonal adjacency (adjacency shared by all graphs).
    support = jnp.dot(y.astype(bf16), wg_ref[...], preferred_element_type=f32)
    y = jnp.dot(adjb_ref[...], support.astype(bf16),
                preferred_element_type=f32) + bg

    # norm2 + relu.
    y = jnp.maximum(layer_norm(y, ln2_w, ln2_b), 0.0)

    # lin2: H -> C.
    y = jnp.dot(y.astype(bf16), w2t_ref[...], preferred_element_type=f32) + b2

    # Residual (re-read x from VMEM instead of keeping x2 live in vregs).
    o_ref[...] = x_ref[...] + y.reshape(tb, v, c)


# -----------------------------------------------------------------------------
# Generation-gated tiling helpers.
# -----------------------------------------------------------------------------
def _tensorcores_per_chip():
    """1 for single-TC chips (v5e / v6e), 2 otherwise (v7x, and conservatively
    any unknown chip: a >=2-step parallel grid is also correct on single-TC)."""
    try:
        kind = jax.devices()[0].device_kind.lower()
    except Exception:
        return 1
    single_tc = any(tag in kind for tag in ("v5e", "v5 lite", "v6e", "v6 lite"))
    return 1 if single_tc else 2


def _choose_batch_tile(batch, nodes, num_tc, max_rows=256):
    """Largest divisor TB of batch with TB*nodes <= max_rows, while keeping at
    least `num_tc` grid steps on multi-TensorCore chips."""
    divs = [t for t in range(1, batch + 1) if batch % t == 0]
    if num_tc >= 2:
        multi = [t for t in divs if batch // t >= num_tc]
        if multi:
            divs = multi
    fitting = [t for t in divs if t * nodes <= max_rows]
    return max(fitting) if fitting else min(divs)


# -----------------------------------------------------------------------------
# Wrapper.
# -----------------------------------------------------------------------------
def graph_res_block(x, adj, params, *, eps=1e-12):
    """x: (B, V, C) float32, adj: (V, V) float32. Returns (B, V, C) float32."""
    B, V, C = x.shape
    H = params["wg"].shape[0]  # out_channels // 2
    assert params["w2"].shape[0] == C, "residual requires in_channels == out_channels"
    assert V % 8 == 0, "this demo kernel assumes V is a multiple of 8"

    num_tc = _tensorcores_per_chip()
    TB = _choose_batch_tile(B, V, num_tc)
    M = TB * V
    grid = (B // TB,)

    bf16 = jnp.bfloat16
    # Weights ship as bf16 (MXU-native); all accumulation stays f32 in-kernel.
    w1t = params["w1"].T.astype(bf16)        # (C, H)
    wg = params["wg"].astype(bf16)           # (H, H)
    w2t = params["w2"].T.astype(bf16)        # (H, C)
    # Block-diagonal adjacency so the per-sample spmm loop collapses into one
    # (M, M) @ (M, H) MXU matmul on the flat tile.
    adj_blk = jnp.kron(jnp.eye(TB, dtype=jnp.float32),
                       adj.astype(jnp.float32)).astype(bf16)   # (M, M)

    # Pack the nine small vectors into one lane-padded f32 tile.
    P = ((max(C, H) + 127) // 128) * 128

    def _row(vec):
        vec = vec.astype(jnp.float32)
        return jnp.pad(vec, (0, P - vec.shape[0]))

    packed = jnp.stack([
        _row(params["lnp_w"]), _row(params["lnp_b"]),
        _row(params["b1"]), _row(params["ln1_w"]), _row(params["ln1_b"]),
        _row(params["bg"]), _row(params["ln2_w"]), _row(params["ln2_b"]),
        _row(params["b2"]),
    ])                                        # (9, P)
    R = ((packed.shape[0] + 7) // 8) * 8
    packed = jnp.pad(packed, ((0, R - packed.shape[0]), (0, 0)))   # (16, P)

    kernel = functools.partial(
        _graph_res_block_kernel, eps=eps, tb=TB, v=V, c=C, h=H)

    full = lambda shape: pl.BlockSpec(shape, lambda i: (0,) * len(shape))

    # Realistic VMEM budget derived from the actual footprint (double-buffered
    # x / out tiles + double-buffered invariants + an allowance for the fused
    # body's f32 intermediates), with 2x headroom, clamped to v7x's 64 MiB.
    x_tile_bytes = TB * V * C * 4
    invariant_bytes = (M * M * 2) + (C * H + H * H + H * C) * 2 + R * P * 4
    footprint = 2 * (2 * x_tile_bytes) + 2 * invariant_bytes + 8 * x_tile_bytes
    vmem_limit = int(min(max(2 * footprint, 8 * 1024 * 1024), 64 * 1024 * 1024))

    return pl.pallas_call(
        kernel,
        out_shape=jax.ShapeDtypeStruct((B, V, C), jnp.float32),
        grid_spec=pltpu.PrefetchScalarGridSpec(
            num_scalar_prefetch=0,
            grid=grid,
            in_specs=[
                pl.BlockSpec((TB, V, C), lambda i: (i, 0, 0)),  # x batch tile
                full((M, M)),                                   # block-diag adjacency
                full((C, H)),                                   # W1^T
                full((H, H)),                                   # Wg
                full((H, C)),                                   # W2^T
                full((R, P)),                                   # packed small params
            ],
            out_specs=pl.BlockSpec((TB, V, C), lambda i: (i, 0, 0)),
        ),
        compiler_params=pltpu.CompilerParams(
            dimension_semantics=("parallel",),     # batch tiles are independent
            vmem_limit_bytes=vmem_limit,
        ),
    )(x, adj_blk, w1t, wg, w2t, packed)


# -----------------------------------------------------------------------------
# Pure-JAX reference (mirrors the PyTorch forward exactly) for verification.
# -----------------------------------------------------------------------------
def graph_res_block_ref(x, adj, p, eps=1e-12):
    def ln(v, w, b):
        u = jnp.mean(v, axis=-1, keepdims=True)
        s = jnp.mean((v - u) ** 2, axis=-1, keepdims=True)
        return w * ((v - u) / jnp.sqrt(s + eps)) + b

    h = jax.nn.relu(ln(x, p["lnp_w"], p["lnp_b"]))               # (B, V, C)
    # GraphLinear lin1 on h^T then transpose back == h @ W1^T + b1
    y = jnp.einsum("bvc,hc->bvh", h, p["w1"]) + p["b1"]
    y = jax.nn.relu(ln(y, p["ln1_w"], p["ln1_b"]))
    support = jnp.einsum("bvh,hk->bvk", y, p["wg"])
    y = jnp.einsum("vw,bwk->bvk", adj, support) + p["bg"]
    y = jax.nn.relu(ln(y, p["ln2_w"], p["ln2_b"]))
    y = jnp.einsum("bvh,ch->bvc", y, p["w2"]) + p["b2"]
    return x + y


# -----------------------------------------------------------------------------
# Deterministic parameter / input construction.
# -----------------------------------------------------------------------------
def make_params(key, in_channels, out_channels):
    H = out_channels // 2
    keys = jax.random.split(key, 8)

    # GraphLinear init: uniform(-1/(in*out), 1/(in*out))
    s1 = 1.0 / (in_channels * H)
    w1 = jax.random.uniform(keys[0], (H, in_channels), jnp.float32, -s1, s1)
    b1 = jax.random.uniform(keys[1], (H,), jnp.float32, -s1, s1)

    s2 = 1.0 / (H * out_channels)
    w2 = jax.random.uniform(keys[2], (out_channels, H), jnp.float32, -s2, s2)
    b2 = jax.random.uniform(keys[3], (out_channels,), jnp.float32, -s2, s2)

    # GraphConvolution init: uniform(-stdv, stdv), stdv = 6/sqrt(in+out)
    sg = 6.0 / math.sqrt(H + H)
    wg = jax.random.uniform(keys[4], (H, H), jnp.float32, -sg, sg)
    bg = jax.random.uniform(keys[5], (H,), jnp.float32, -sg, sg)

    return dict(
        w1=w1, b1=b1, wg=wg, bg=bg, w2=w2, b2=b2,
        lnp_w=jnp.ones((in_channels,), jnp.float32),
        lnp_b=jnp.zeros((in_channels,), jnp.float32),
        ln1_w=jnp.ones((H,), jnp.float32),
        ln1_b=jnp.zeros((H,), jnp.float32),
        ln2_w=jnp.ones((H,), jnp.float32),
        ln2_b=jnp.zeros((H,), jnp.float32),
    )


def make_adjacency(num_nodes):
    """Row-normalized ring graph with self-loops (dense stand-in for the
    sparse SMPL/MANO adjacency that the original module loads from disk)."""
    idx = jnp.arange(num_nodes)
    eye = jnp.eye(num_nodes, dtype=jnp.float32)
    ring = eye[(idx + 1) % num_nodes] + eye[(idx - 1) % num_nodes]
    adj = eye + ring
    return adj / jnp.sum(adj, axis=-1, keepdims=True)


if __name__ == "__main__":
    # batch=16, V=16 graph nodes, C=128 channels (in_channels == out_channels).
    # Single-TC chips (v5e/v6e): TB=16 -> grid=(1,), M=256 rows per step.
    # Dual-TC chips (v7x):       TB=8  -> grid=(2,), both TensorCores busy.
    B, V, C = 16, 16, 128

    key = jax.random.PRNGKey(0)
    kx, kp = jax.random.split(key)
    x = jax.random.normal(kx, (B, V, C), dtype=jnp.float32)
    adj = make_adjacency(V)
    params = make_params(kp, C, C)

    out = jax.block_until_ready(graph_res_block(x, adj, params))
    ref = graph_res_block_ref(x, adj, params)

    assert out.shape == (B, V, C)
    max_err = float(jnp.max(jnp.abs(out - ref)))
    # bf16 operands at the MXU boundary (f32 accumulation) -> compare against
    # the f32 reference with a correspondingly looser tolerance.
    assert jnp.allclose(out, ref, atol=2e-3, rtol=2e-3), (
        f"mismatch vs reference (max abs err {max_err:.2e})")

    print("KERNEL_OK")
</pallas_src>

<mosaic_0001>
module attributes {stable_mosaic.version = 11 : i64} {
  func.func @_graph_res_block_kernel(%arg0: i32, %arg1: memref<8x16x128xf32, #tpu.memory_space<vmem>>, %arg2: memref<128x128xbf16, #tpu.memory_space<vmem>>, %arg3: memref<128x64xbf16, #tpu.memory_space<vmem>>, %arg4: memref<64x64xbf16, #tpu.memory_space<vmem>>, %arg5: memref<64x128xbf16, #tpu.memory_space<vmem>>, %arg6: memref<16x128xf32, #tpu.memory_space<vmem>>, %arg7: memref<8x16x128xf32, #tpu.memory_space<vmem>>) attributes {dimension_semantics = [#tpu.dimension_semantics<parallel>], iteration_bounds = array<i64: 2>, scalar_prefetch = 0 : i64, scratch_operands = 0 : i64, tpu.core_type = #tpu.core_type<tc>, window_params = [{transform_indices = @transform_0, window_bounds = array<i64: 8, 16, 128>}, {pipeline_mode = #tpu.pipeline_mode<synchronous>, transform_indices = @transform_1, window_bounds = array<i64: 128, 128>}, {pipeline_mode = #tpu.pipeline_mode<synchronous>, transform_indices = @transform_2, window_bounds = array<i64: 128, 64>}, {pipeline_mode = #tpu.pipeline_mode<synchronous>, transform_indices = @transform_3, window_bounds = array<i64: 64, 64>}, {pipeline_mode = #tpu.pipeline_mode<synchronous>, transform_indices = @transform_4, window_bounds = array<i64: 64, 128>}, {pipeline_mode = #tpu.pipeline_mode<synchronous>, transform_indices = @transform_5, window_bounds = array<i64: 16, 128>}, {transform_indices = @transform_6, window_bounds = array<i64: 8, 16, 128>}]} {
    %c0 = arith.constant 0 : index
    %c0_0 = arith.constant 0 : index
    %0 = vector.load %arg6[%c0, %c0_0] : memref<16x128xf32, #tpu.memory_space<vmem>>, vector<16x128xf32>
    %1 = vector.extract_strided_slice %0 {offsets = [0, 0], sizes = [1, 128], strides = [1, 1]} : vector<16x128xf32> to vector<1x128xf32>
    %2 = vector.extract_strided_slice %0 {offsets = [1, 0], sizes = [1, 128], strides = [1, 1]} : vector<16x128xf32> to vector<1x128xf32>
    %3 = vector.extract_strided_slice %0 {offsets = [2, 0], sizes = [1, 64], strides = [1, 1]} : vector<16x128xf32> to vector<1x64xf32>
    %4 = vector.extract_strided_slice %0 {offsets = [3, 0], sizes = [1, 64], strides = [1, 1]} : vector<16x128xf32> to vector<1x64xf32>
    %5 = vector.extract_strided_slice %0 {offsets = [4, 0], sizes = [1, 64], strides = [1, 1]} : vector<16x128xf32> to vector<1x64xf32>
    %6 = vector.extract_strided_slice %0 {offsets = [5, 0], sizes = [1, 64], strides = [1, 1]} : vector<16x128xf32> to vector<1x64xf32>
    %7 = vector.extract_strided_slice %0 {offsets = [6, 0], sizes = [1, 64], strides = [1, 1]} : vector<16x128xf32> to vector<1x64xf32>
    %8 = vector.extract_strided_slice %0 {offsets = [7, 0], sizes = [1, 64], strides = [1, 1]} : vector<16x128xf32> to vector<1x64xf32>
    %9 = vector.extract_strided_slice %0 {offsets = [8, 0], sizes = [1, 128], strides = [1, 1]} : vector<16x128xf32> to vector<1x128xf32>
    %c0_1 = arith.constant 0 : index
    %c0_2 = arith.constant 0 : index
    %c0_3 = arith.constant 0 : index
    %10 = vector.load %arg1[%c0_1, %c0_2, %c0_3] : memref<8x16x128xf32, #tpu.memory_space<vmem>>, vector<8x16x128xf32>
    %11 = vector.shape_cast %10 : vector<8x16x128xf32> to vector<128x128xf32>
    %cst = arith.constant dense<0.000000e+00> : vector<128xf32>
    %12 = vector.multi_reduction <add>, %11, %cst [1] : vector<128x128xf32> to vector<128xf32>
    %13 = vector.shape_cast %12 : vector<128xf32> to vector<128x1xf32>
    %cst_4 = arith.constant 1.280000e+02 : f32
    %14 = vector.broadcast %cst_4 : f32 to vector<128x1xf32>
    %15 = arith.divf %13, %14 : vector<128x1xf32>
    %16 = vector.broadcast %15 : vector<128x1xf32> to vector<128x128xf32>
    %17 = arith.subf %11, %16 : vector<128x128xf32>
    %18 = arith.mulf %17, %17 : vector<128x128xf32>
    %cst_5 = arith.constant dense<0.000000e+00> : vector<128xf32>
    %19 = vector.multi_reduction <add>, %18, %cst_5 [1] : vector<128x128xf32> to vector<128xf32>
    %20 = vector.shape_cast %19 : vector<128xf32> to vector<128x1xf32>
    %cst_6 = arith.constant 1.280000e+02 : f32
    %21 = vector.broadcast %cst_6 : f32 to vector<128x1xf32>
    %22 = arith.divf %20, %21 : vector<128x1xf32>
    %cst_7 = arith.constant 9.99999996E-13 : f32
    %23 = vector.broadcast %cst_7 : f32 to vector<128x1xf32>
    %24 = arith.addf %22, %23 : vector<128x1xf32>
    %25 = math.rsqrt %24 : vector<128x1xf32>
    %26 = vector.broadcast %25 : vector<128x1xf32> to vector<128x128xf32>
    %27 = arith.mulf %17, %26 : vector<128x128xf32>
    %28 = vector.broadcast %1 : vector<1x128xf32> to vector<128x128xf32>
    %29 = arith.mulf %28, %27 : vector<128x128xf32>
    %30 = vector.broadcast %2 : vector<1x128xf32> to vector<128x128xf32>
    %31 = arith.addf %29, %30 : vector<128x128xf32>
    %cst_8 = arith.constant 0.000000e+00 : f32
    %32 = vector.broadcast %cst_8 : f32 to vector<128x128xf32>
    %33 = arith.maximumf %31, %32 : vector<128x128xf32>
    %34 = arith.truncf %33 : vector<128x128xf32> to vector<128x128xbf16>
    %c0_9 = arith.constant 0 : index
    %c0_10 = arith.constant 0 : index
    %35 = vector.load %arg3[%c0_9, %c0_10] : memref<128x64xbf16, #tpu.memory_space<vmem>>, vector<128x64xbf16>
    %cst_11 = arith.constant dense<0.000000e+00> : vector<128x64xf32>
    %36 = tpu.matmul %34, %35, %cst_11 {dimension_numbers = #tpu.dot_dimension_numbers<[1], [0], [0], [1], [0, 0, 1, 1], [], []>} : vector<128x128xbf16>, vector<128x64xbf16>, vector<128x64xf32> -> vector<128x64xf32>
    %37 = vector.broadcast %3 : vector<1x64xf32> to vector<128x64xf32>
    %38 = arith.addf %36, %37 : vector<128x64xf32>
    %cst_12 = arith.constant dense<0.000000e+00> : vector<128xf32>
    %39 = vector.multi_reduction <add>, %38, %cst_12 [1] : vector<128x64xf32> to vector<128xf32>
    %40 = vector.shape_cast %39 : vector<128xf32> to vector<128x1xf32>
    %cst_13 = arith.constant 6.400000e+01 : f32
    %41 = vector.broadcast %cst_13 : f32 to vector<128x1xf32>
    %42 = arith.divf %40, %41 : vector<128x1xf32>
    %43 = vector.broadcast %42 : vector<128x1xf32> to vector<128x64xf32>
    %44 = arith.subf %38, %43 : vector<128x64xf32>
    %45 = arith.mulf %44, %44 : vector<128x64xf32>
    %cst_14 = arith.constant dense<0.000000e+00> : vector<128xf32>
    %46 = vector.multi_reduction <add>, %45, %cst_14 [1] : vector<128x64xf32> to vector<128xf32>
    %47 = vector.shape_cast %46 : vector<128xf32> to vector<128x1xf32>
    %cst_15 = arith.constant 6.400000e+01 : f32
    %48 = vector.broadcast %cst_15 : f32 to vector<128x1xf32>
    %49 = arith.divf %47, %48 : vector<128x1xf32>
    %cst_16 = arith.constant 9.99999996E-13 : f32
    %50 = vector.broadcast %cst_16 : f32 to vector<128x1xf32>
    %51 = arith.addf %49, %50 : vector<128x1xf32>
    %52 = math.rsqrt %51 : vector<128x1xf32>
    %53 = vector.broadcast %52 : vector<128x1xf32> to vector<128x64xf32>
    %54 = arith.mulf %44, %53 : vector<128x64xf32>
    %55 = vector.broadcast %4 : vector<1x64xf32> to vector<128x64xf32>
    %56 = arith.mulf %55, %54 : vector<128x64xf32>
    %57 = vector.broadcast %5 : vector<1x64xf32> to vector<128x64xf32>
    %58 = arith.addf %56, %57 : vector<128x64xf32>
    %cst_17 = arith.constant 0.000000e+00 : f32
    %59 = vector.broadcast %cst_17 : f32 to vector<128x64xf32>
    %60 = arith.maximumf %58, %59 : vector<128x64xf32>
    %61 = arith.truncf %60 : vector<128x64xf32> to vector<128x64xbf16>
    %c0_18 = arith.constant 0 : index
    %c0_19 = arith.constant 0 : index
    %62 = vector.load %arg4[%c0_18, %c0_19] : memref<64x64xbf16, #tpu.memory_space<vmem>>, vector<64x64xbf16>
    %cst_20 = arith.constant dense<0.000000e+00> : vector<128x64xf32>
    %63 = tpu.matmul %61, %62, %cst_20 {dimension_numbers = #tpu.dot_dimension_numbers<[1], [0], [0], [1], [0, 0, 1, 1], [], []>} : vector<128x64xbf16>, vector<64x64xbf16>, vector<128x64xf32> -> vector<128x64xf32>
    %c0_21 = arith.constant 0 : index
    %c0_22 = arith.constant 0 : index
    %64 = vector.load %arg2[%c0_21, %c0_22] : memref<128x128xbf16, #tpu.memory_space<vmem>>, vector<128x128xbf16>
    %65 = arith.truncf %63 : vector<128x64xf32> to vector<128x64xbf16>
    %cst_23 = arith.constant dense<0.000000e+00> : vector<128x64xf32>
    %66 = tpu.matmul %64, %65, %cst_23 {dimension_numbers = #tpu.dot_dimension_numbers<[1], [0], [0], [1], [0, 0, 1, 1], [], []>} : vector<128x128xbf16>, vector<128x64xbf16>, vector<128x64xf32> -> vector<128x64xf32>
    %67 = vector.broadcast %6 : vector<1x64xf32> to vector<128x64xf32>
    %68 = arith.addf %66, %67 : vector<128x64xf32>
    %cst_24 = arith.constant dense<0.000000e+00> : vector<128xf32>
    %69 = vector.multi_reduction <add>, %68, %cst_24 [1] : vector<128x64xf32> to vector<128xf32>
    %70 = vector.shape_cast %69 : vector<128xf32> to vector<128x1xf32>
    %cst_25 = arith.constant 6.400000e+01 : f32
    %71 = vector.broadcast %cst_25 : f32 to vector<128x1xf32>
    %72 = arith.divf %70, %71 : vector<128x1xf32>
    %73 = vector.broadcast %72 : vector<128x1xf32> to vector<128x64xf32>
    %74 = arith.subf %68, %73 : vector<128x64xf32>
    %75 = arith.mulf %74, %74 : vector<128x64xf32>
    %cst_26 = arith.constant dense<0.000000e+00> : vector<128xf32>
    %76 = vector.multi_reduction <add>, %75, %cst_26 [1] : vector<128x64xf32> to vector<128xf32>
    %77 = vector.shape_cast %76 : vector<128xf32> to vector<128x1xf32>
    %cst_27 = arith.constant 6.400000e+01 : f32
    %78 = vector.broadcast %cst_27 : f32 to vector<128x1xf32>
    %79 = arith.divf %77, %78 : vector<128x1xf32>
    %cst_28 = arith.constant 9.99999996E-13 : f32
    %80 = vector.broadcast %cst_28 : f32 to vector<128x1xf32>
    %81 = arith.addf %79, %80 : vector<128x1xf32>
    %82 = math.rsqrt %81 : vector<128x1xf32>
    %83 = vector.broadcast %82 : vector<128x1xf32> to vector<128x64xf32>
    %84 = arith.mulf %74, %83 : vector<128x64xf32>
    %85 = vector.broadcast %7 : vector<1x64xf32> to vector<128x64xf32>
    %86 = arith.mulf %85, %84 : vector<128x64xf32>
    %87 = vector.broadcast %8 : vector<1x64xf32> to vector<128x64xf32>
    %88 = arith.addf %86, %87 : vector<128x64xf32>
    %cst_29 = arith.constant 0.000000e+00 : f32
    %89 = vector.broadcast %cst_29 : f32 to vector<128x64xf32>
    %90 = arith.maximumf %88, %89 : vector<128x64xf32>
    %91 = arith.truncf %90 : vector<128x64xf32> to vector<128x64xbf16>
    %c0_30 = arith.constant 0 : index
    %c0_31 = arith.constant 0 : index
    %92 = vector.load %arg5[%c0_30, %c0_31] : memref<64x128xbf16, #tpu.memory_space<vmem>>, vector<64x128xbf16>
    %cst_32 = arith.constant dense<0.000000e+00> : vector<128x128xf32>
    %93 = tpu.matmul %91, %92, %cst_32 {dimension_numbers = #tpu.dot_dimension_numbers<[1], [0], [0], [1], [0, 0, 1, 1], [], []>} : vector<128x64xbf16>, vector<64x128xbf16>, vector<128x128xf32> -> vector<128x128xf32>
    %94 = vector.broadcast %9 : vector<1x128xf32> to vector<128x128xf32>
    %95 = arith.addf %93, %94 : vector<128x128xf32>
    %c0_33 = arith.constant 0 : index
    %c0_34 = arith.constant 0 : index
    %c0_35 = arith.constant 0 : index
    %96 = vector.load %arg1[%c0_33, %c0_34, %c0_35] : memref<8x16x128xf32, #tpu.memory_space<vmem>>, vector<8x16x128xf32>
    %97 = vector.shape_cast %95 : vector<128x128xf32> to vector<8x16x128xf32>
    %98 = arith.addf %96, %97 : vector<8x16x128xf32>
    %c0_36 = arith.constant 0 : index
    %c0_37 = arith.constant 0 : index
    %c0_38 = arith.constant 0 : index
    %99 = vector.load %arg7[%c0_36, %c0_37, %c0_38] : memref<8x16x128xf32, #tpu.memory_space<vmem>>, vector<8x16x128xf32>
    tpu.vector_store %arg7[%c0_36, %c0_37, %c0_38], %98 {strides = array<i32>} : memref<8x16x128xf32, #tpu.memory_space<vmem>>, vector<8x16x128xf32>,
    return
  }
  func.func @transform_0(%arg0: i32) -> (i32, i32, i32) {
    %c0_i32 = arith.constant 0 : i32
    %c0_i32_0 = arith.constant 0 : i32
    %c0_i32_1 = arith.constant 0 : i32
    return %arg0, %c0_i32, %c0_i32_0 : i32, i32, i32
  }
  func.func @transform_1(%arg0: i32) -> (i32, i32) {
    %c0_i32 = arith.constant 0 : i32
    %c0_i32_0 = arith.constant 0 : i32
    %c0_i32_1 = arith.constant 0 : i32
    return %c0_i32, %c0_i32_0 : i32, i32
  }
  func.func @transform_2(%arg0: i32) -> (i32, i32) {
    %c0_i32 = arith.constant 0 : i32
    %c0_i32_0 = arith.constant 0 : i32
    %c0_i32_1 = arith.constant 0 : i32
    return %c0_i32, %c0_i32_0 : i32, i32
  }
  func.func @transform_3(%arg0: i32) -> (i32, i32) {
    %c0_i32 = arith.constant 0 : i32
    %c0_i32_0 = arith.constant 0 : i32
    %c0_i32_1 = arith.constant 0 : i32
    return %c0_i32, %c0_i32_0 : i32, i32
  }
  func.func @transform_4(%arg0: i32) -> (i32, i32) {
    %c0_i32 = arith.constant 0 : i32
    %c0_i32_0 = arith.constant 0 : i32
    %c0_i32_1 = arith.constant 0 : i32
    return %c0_i32, %c0_i32_0 : i32, i32
  }
  func.func @transform_5(%arg0: i32) -> (i32, i32) {
    %c0_i32 = arith.constant 0 : i32
    %c0_i32_0 = arith.constant 0 : i32
    %c0_i32_1 = arith.constant 0 : i32
    return %c0_i32, %c0_i32_0 : i32, i32
  }
  func.func @transform_6(%arg0: i32) -> (i32, i32, i32) {
    %c0_i32 = arith.constant 0 : i32
    %c0_i32_0 = arith.constant 0 : i32
    %c0_i32_1 = arith.constant 0 : i32
    return %arg0, %c0_i32, %c0_i32_0 : i32, i32, i32
  }
}

</mosaic_0001>

<llo_original>
// kernel: tpu_custom_call.1
$region0: #{tpu_custom_call.1}
  #allocation0 [shape = 'u32[]', space=smem, size = 0x4, offset = 0x4, fixed_abs, tag = 'smem constant byte address 0x4 - core index']
  #allocation1 [shape = 'u32[144,128]{1,0:T(1,128)}', space=vmem, size = 0x12000, scoped, tag = 'internal scratch']
  %s0 = inlined_call_operand.hbm [shape: f32[16,16,128], index: 0, kind: input, shape index: {}]
  %s1 = inlined_call_operand.vmem [shape: bf16[128,128], index: 1, kind: input, shape index: {}]
  %s2 = inlined_call_operand.vmem [shape: bf16[128,64], index: 2, kind: input, shape index: {}]
  %s3 = inlined_call_operand.vmem [shape: bf16[64,64], index: 3, kind: input, shape index: {}]
  %s4 = inlined_call_operand.hbm [shape: bf16[64,128], index: 4, kind: input, shape index: {}]
  %s5 = inlined_call_operand.vmem [shape: f32[16,128], index: 5, kind: input, shape index: {}]
  %s6 = inlined_call_operand.hbm [shape: f32[16,16,128], index: 6, kind: output, shape index: {}]
  %s7 = sld [smem:[#allocation0]]
  $region65: #{tpu_custom_call.1} parent=0
    _
  %s9 = ssub.s32 1, %s7
  %s10 = scalar_select 0, %s9, %s7
  $region1: #{tpu_custom_call.1} parent=0
    #allocation2 [shape = 'u8[131072]{0}', space=vmem, size = 0x20000, scoped, tag = 'input window, operand 0']
    #allocation3 [shape = 's32[2]{0}', space=sflag, size = 0x8, scoped, tag = 'scoped memory for tpu_custom_call.1']
    #allocation4 [shape = 's32[2]{0}', space=sflag, size = 0x8, scoped, tag = 'scoped memory for tpu_custom_call.1']
    #allocation5 [shape = 'u8[16384]{0}', space=vmem, size = 0x4000, scoped, tag = 'input window, operand 4, single buffered']
    #allocation6 [shape = 's32[1]{0}', space=sflag, size = 0x4, scoped, tag = 'scoped memory for tpu_custom_call.1']
    #allocation7 [shape = 'u8[131072]{0}', space=vmem, size = 0x20000, scoped, tag = 'output window, operand 0']
    %11 = vsyncpa [#allocation3], 0
    %s12 = scalar_lea.sflag [#allocation3], 1
    %13 = vsyncpa %s12, 0
    %14 = vsyncpa [#allocation6], 0
    %15 = vsyncpa [#allocation4], 0
    %s16 = scalar_lea.sflag [#allocation4], 1
    %17 = vsyncpa %s16, 0
    loop: start=0, step=1, limit=4
    $region2: #{tpu_custom_call.1} parent=1 // loop_pre_header
      _
    $region3: #{tpu_custom_call.1} parent=1 // loop_header
      %s19 = sphi 0, %s23
      %p20 = scmp.ge.s32.totalorder %s19, 4
      %s29 = sphi 0, %s31
      %s32 = sphi 0, %s29
      %s33 = sphi 0, %s32
      %s49 = sphi 0, %s33
      %s53 = sphi 0, %s53
      %s55 = sphi 0, %s53
      %s56 = sphi 0, %s55
      %s70 = sphi 0, %s56
      %s74 = sphi 0, %s74
      %s76 = sphi 0, %s74
      %s77 = sphi 0, %s76
      %s91 = sphi 0, %s77
      %s95 = sphi 0, %s95
      %s97 = sphi 0, %s95
      %s98 = sphi 0, %s97
      %s112 = sphi 0, %s98
      %s116 = sphi 0, %s116
      %s118 = sphi 0, %s116
      %s119 = sphi 0, %s118
      %s133 = sphi 0, %s119
      %s137 = sphi 0, %s137
      %s139 = sphi 0, %s137
      %s140 = sphi 0, %s139
      %s154 = sphi 0, %s140
      %s160 = sphi 0, %s162
      %s163 = sphi 0, %s160
      %s164 = sphi 0, %s163
      %s180 = sphi 0, %s164
    $region4: #{tpu_custom_call.1} parent=1 // loop_header_branch
      %22 = sbr.rel (%p20) target = $region8
    $region5: #{tpu_custom_call.1} parent=1 // loop_body
      %s24 = ssub.s32 %s19, 1
      %s25 = ssub.s32 %s19, 2
      %s26 = sadd.s32 %s19, 1
      %s27 = ssub.s32 %s19, %s26
      %p28 = scmp.eq.s32.totalorder %s27, 0
      %s30 = sadd.s32 %s29, 1
      %s31 = scalar_select %p28, %s29, %s30
      %p34 = pneg %p28
      %p35 = scmp.eq.s32.totalorder %s19, 1
      %p36 = por %p34, %p35
      %p37 = scmp.ne.s32.totalorder %s29, %s32
      %p38 = scmp.eq.s32.totalorder %s19, 0
      %p39 = por %p37, %p38
      %p40 = scmp.ne.s32.totalorder %s29, %s32
      %p41 = scmp.eq.s32.totalorder %s24, 1
      %p42 = por %p40, %p41
      %p43 = scmp.ne.s32.totalorder %s32, %s33
      %p44 = scmp.eq.s32.totalorder %s24, 0
      %p45 = por %p43, %p44
      %p46 = scmp.ne.s32.totalorder %s32, %s33
      %p47 = scmp.eq.s32.totalorder %s25, 1
      %p48 = por %p46, %p47
      %p50 = scmp.ne.s32.totalorder %s33, %s49
      %p51 = scmp.eq.s32.totalorder %s25, 0
      %p52 = por %p50, %p51
      %s54 = sadd.s32 %s53, 1
      %p57 = scmp.eq.s32.totalorder %s19, 1
      %p58 = scmp.ne.s32.totalorder %s53, %s55
      %p59 = scmp.eq.s32.totalorder %s19, 0
      %p60 = por %p58, %p59
      %p61 = scmp.ne.s32.totalorder %s53, %s55
      %p62 = scmp.eq.s32.totalorder %s24, 1
      %p63 = por %p61, %p62
      %p64 = scmp.ne.s32.totalorder %s55, %s56
      %p65 = scmp.eq.s32.totalorder %s24, 0
      %p66 = por %p64, %p65
      %p67 = scmp.ne.s32.totalorder %s55, %s56
      %p68 = scmp.eq.s32.totalorder %s25, 1
      %p69 = por %p67, %p68
      %p71 = scmp.ne.s32.totalorder %s56, %s70
      %p72 = scmp.eq.s32.totalorder %s25, 0
      %p73 = por %p71, %p72
      %s75 = sadd.s32 %s74, 1
      %p78 = scmp.eq.s32.totalorder %s19, 1
      %p79 = scmp.ne.s32.totalorder %s74, %s76
      %p80 = scmp.eq.s32.totalorder %s19, 0
      %p81 = por %p79, %p80
      %p82 = scmp.ne.s32.totalorder %s74, %s76
      %p83 = scmp.eq.s32.totalorder %s24, 1
      %p84 = por %p82, %p83
      %p85 = scmp.ne.s32.totalorder %s76, %s77
      %p86 = scmp.eq.s32.totalorder %s24, 0
      %p87 = por %p85, %p86
      %p88 = scmp.ne.s32.totalorder %s76, %s77
      %p89 = scmp.eq.s32.totalorder %s25, 1
      %p90 = por %p88, %p89
      %p92 = scmp.ne.s32.totalorder %s77, %s91
      %p93 = scmp.eq.s32.totalorder %s25, 0
      %p94 = por %p92, %p93
      %s96 = sadd.s32 %s95, 1
      %p99 = scmp.eq.s32.totalorder %s19, 1
      %p100 = scmp.ne.s32.totalorder %s95, %s97
      %p101 = scmp.eq.s32.totalorder %s19, 0
      %p102 = por %p100, %p101
      %p103 = scmp.ne.s32.totalorder %s95, %s97
      %p104 = scmp.eq.s32.totalorder %s24, 1
      %p105 = por %p103, %p104
      %p106 = scmp.ne.s32.totalorder %s97, %s98
      %p107 = scmp.eq.s32.totalorder %s24, 0
      %p108 = por %p106, %p107
      %p109 = scmp.ne.s32.totalorder %s97, %s98
      %p110 = scmp.eq.s32.totalorder %s25, 1
      %p111 = por %p109, %p110
      %p113 = scmp.ne.s32.totalorder %s98, %s112
      %p114 = scmp.eq.s32.totalorder %s25, 0
      %p115 = por %p113, %p114
      %s117 = sadd.s32 %s116, 1
      %p120 = scmp.eq.s32.totalorder %s19, 1
      %p121 = scmp.ne.s32.totalorder %s116, %s118
      %p122 = scmp.eq.s32.totalorder %s19, 0
      %p123 = por %p121, %p122
      %p124 = scmp.ne.s32.totalorder %s116, %s118
      %p125 = scmp.eq.s32.totalorder %s24, 1
      %p126 = por %p124, %p125
      %p127 = scmp.ne.s32.totalorder %s118, %s119
      %p128 = scmp.eq.s32.totalorder %s24, 0
      %p129 = por %p127, %p128
      %p130 = scmp.ne.s32.totalorder %s118, %s119
      %p131 = scmp.eq.s32.totalorder %s25, 1
      %p132 = por %p130, %p131
      %p134 = scmp.ne.s32.totalorder %s119, %s133
      %p135 = scmp.eq.s32.totalorder %s25, 0
      %p136 = por %p134, %p135
      %s138 = sadd.s32 %s137, 1
      %p141 = scmp.eq.s32.totalorder %s19, 1
      %p142 = scmp.ne.s32.totalorder %s137, %s139
      %p143 = scmp.eq.s32.totalorder %s19, 0
      %p144 = por %p142, %p143
      %p145 = scmp.ne.s32.totalorder %s137, %s139
      %p146 = scmp.eq.s32.totalorder %s24, 1
      %p147 = por %p145, %p146
      %p148 = scmp.ne.s32.totalorder %s139, %s140
      %p149 = scmp.eq.s32.totalorder %s24, 0
      %p150 = por %p148, %p149
      %p151 = scmp.ne.s32.totalorder %s139, %s140
      %p152 = scmp.eq.s32.totalorder %s25, 1
      %p153 = por %p151, %p152
      %p155 = scmp.ne.s32.totalorder %s140, %s154
      %p156 = scmp.eq.s32.totalorder %s25, 0
      %p157 = por %p155, %p156
      %s158 = ssub.s32 %s19, %s26
      %p159 = scmp.eq.s32.totalorder %s158, 0
      %s161 = sadd.s32 %s160, 1
      %s162 = scalar_select %p159, %s160, %s161
      %p165 = pneg %p159
      %p166 = scmp.eq.s32.totalorder %s19, 1
      %p167 = por %p165, %p166
      %p168 = scmp.ne.s32.totalorder %s160, %s163
      %p169 = scmp.eq.s32.totalorder %s19, 0
      %p170 = por %p168, %p169
      %p171 = scmp.ne.s32.totalorder %s160, %s163
      %p172 = scmp.eq.s32.totalorder %s24, 1
      %p173 = por %p171, %p172
      %p174 = scmp.ne.s32.totalorder %s163, %s164
      %p175 = scmp.eq.s32.totalorder %s24, 0
      %p176 = por %p174, %p175
      %p177 = scmp.ne.s32.totalorder %s163, %s164
      %p178 = scmp.eq.s32.totalorder %s25, 1
      %p179 = por %p177, %p178
      %p181 = scmp.ne.s32.totalorder %s164, %s180
      %p182 = scmp.eq.s32.totalorder %s25, 0
      %p183 = por %p181, %p182
      %p184 = scmp.le.s32.totalorder 1, %s19
      %p185 = scmp.lt.s32.totalorder %s19, 3
      %p186 = pnand %p184, %p185
      %p187 = pneg %p186
      // Predicated region
      $region9: #{tpu_custom_call.1} parent=5 // pred_check
        _
      $region10: #{tpu_custom_call.1} parent=5 // pred_check_branch
        %189 = sbr.rel (%p186) target = $region12
      $region11: #{tpu_custom_call.1} parent=5 // pred_region
        %s190 = ssub.s32 %s19, 1
        // Predicated region
        $region13: #{tpu_custom_call.1} parent=11 // pred_check
          %p191 = pneg %p66
        $region14: #{tpu_custom_call.1} parent=11 // pred_check_branch
          %193 = sbr.rel (%p191) target = $region16
        $region15: #{tpu_custom_call.1} parent=11 // pred_region
          _
        $region16: #{tpu_custom_call.1} parent=11 // pred_fallthru
          _
        // Predicated region
        $region17: #{tpu_custom_call.1} parent=11 // pred_check
          %p194 = pneg %p87
        $region18: #{tpu_custom_call.1} parent=11 // pred_check_branch
          %196 = sbr.rel (%p194) target = $region20
        $region19: #{tpu_custom_call.1} parent=11 // pred_region
          _
        $region20: #{tpu_custom_call.1} parent=11 // pred_fallthru
          _
        // Predicated region
        $region21: #{tpu_custom_call.1} parent=11 // pred_check
          %p197 = pneg %p108
        $region22: #{tpu_custom_call.1} parent=11 // pred_check_branch
          %199 = sbr.rel (%p197) target = $region24
        $region23: #{tpu_custom_call.1} parent=11 // pred_region
          _
        $region24: #{tpu_custom_call.1} parent=11 // pred_fallthru
          _
        // Predicated region
        $region25: #{tpu_custom_call.1} parent=11 // pred_check
          %p200 = pneg %p129
        $region26: #{tpu_custom_call.1} parent=11 // pred_check_branch
          %202 = sbr.rel (%p200) target = $region28
        $region27: #{tpu_custom_call.1} parent=11 // pred_region
          %s204 = ssub.s32 512, 512
          %205 = vsyncadd [#allocation6], %s204
          %s206 = sshll.u32 [#allocation5], 4
          %s207 = int_to_ptr.vmem [resolvable:$true] %s206
          %212 = dma.hbm_to_vmem [thread:$0]  %s4, 512, %s207, [#allocation6], 64, 64, 4
        $region28: #{tpu_custom_call.1} parent=11 // pred_fallthru
          _
        // Predicated region
        $region29: #{tpu_custom_call.1} parent=11 // pred_check
          %p213 = pneg %p150
        $region30: #{tpu_custom_call.1} parent=11 // pred_check_branch
          %215 = sbr.rel (%p213) target = $region32
        $region31: #{tpu_custom_call.1} parent=11 // pred_region
          _
        $region32: #{tpu_custom_call.1} parent=11 // pred_fallthru
          _
      $region12: #{tpu_custom_call.1} parent=5 // pred_fallthru
        _
      %p216 = scmp.lt.s32.totalorder %s19, 2
      // Predicated region
      $region33: #{tpu_custom_call.1} parent=5 // pred_check
        %p217 = pneg %p216
      $region34: #{tpu_custom_call.1} parent=5 // pred_check_branch
        %219 = sbr.rel (%p217) target = $region36
      $region35: #{tpu_custom_call.1} parent=5 // pred_region
        // Predicated region
        $region37: #{tpu_custom_call.1} parent=35 // pred_check
          %p220 = pneg %p39
        $region38: #{tpu_custom_call.1} parent=35 // pred_check_branch
          %222 = sbr.rel (%p220) target = $region40
        $region39: #{tpu_custom_call.1} parent=35 // pred_region
          %s223 = sand.u32 %s29, 1
          %s224 = scalar_lea.sflag [#allocation3], %s223
          %s225 = sand.u32 %s29, 1
          %s226 = smul.addr %s225, 128
          %s227 = scalar_lea.vmem [#allocation2], %s226
          %s228 = smul.u32 8, %s19
          %s230 = ssub.s32 2048, 2048
          %231 = vsyncadd %s224, %s230
          %s232 = smul.addr %s228, 2
          %s233 = smul.addr %s232, 128
          %s234 = scalar_lea.hbm %s0, %s233
          %s235 = sshll.u32 %s227, 4
          %s236 = int_to_ptr.vmem [resolvable:$true] %s235
          %241 = dma.hbm_to_vmem [thread:$0]  %s234, 2048, %s236, %s224, 128, 128, 8
        $region40: #{tpu_custom_call.1} parent=35 // pred_fallthru
          _
      $region36: #{tpu_custom_call.1} parent=5 // pred_fallthru
        _
      %p242 = scmp.le.s32.totalorder 1, %s19
      %p243 = scmp.lt.s32.totalorder %s19, 3
      %p244 = pnand %p242, %p243
      %p245 = pneg %p244
      // Predicated region
      $region41: #{tpu_custom_call.1} parent=5 // pred_check
        _
      $region42: #{tpu_custom_call.1} parent=5 // pred_check_branch
        %247 = sbr.rel (%p244) target = $region44
      $region43: #{tpu_custom_call.1} parent=5 // pred_region
        %s248 = ssub.s32 %s19, 1
        %s249 = sand.u32 %s32, 1
        %s250 = scalar_lea.sflag [#allocation3], %s249
        %s251 = sand.u32 %s32, 1
        %s252 = smul.addr %s251, 128
        %s253 = scalar_lea.vmem [#allocation2], %s252
        // Predicated region
        $region45: #{tpu_custom_call.1} parent=43 // pred_check
          %p254 = pneg %p45
        $region46: #{tpu_custom_call.1} parent=43 // pred_check_branch
          %256 = sbr.rel (%p254) target = $region48
        $region47: #{tpu_custom_call.1} parent=43 // pred_region
          %257 = dma.done %s250, 2048
        $region48: #{tpu_custom_call.1} parent=43 // pred_fallthru
          _
        // Predicated region
        $region49: #{tpu_custom_call.1} parent=43 // pred_check
          %p258 = pneg %p129
        $region50: #{tpu_custom_call.1} parent=43 // pred_check_branch
          %260 = sbr.rel (%p258) target = $region52
        $region51: #{tpu_custom_call.1} parent=43 // pred_region
          %261 = dma.done [#allocation6], 512
        $region52: #{tpu_custom_call.1} parent=43 // pred_fallthru
          _
        %s262 = sand.u32 %s32, 1
        %s263 = scalar_lea.sflag [#allocation3], %s262
        %s264 = sand.u32 %s32, 1
        %s265 = smul.addr %s264, 128
        %s266 = scalar_lea.vmem [#allocation2], %s265
        %p267 = pneg %p45
        %p268 = pneg %p42
        %p269 = pneg %p66
        %p270 = pneg %p63
        %p271 = pneg %p87
        %p272 = pneg %p84
        %p273 = pneg %p108
        %p274 = pneg %p105
        %p275 = pneg %p129
        %p276 = pneg %p126
        %p277 = pneg %p150
        %p278 = pneg %p147
        %p279 = pneg %p176
        %p280 = pneg %p173
        %s281 = sand.u32 %s163, 1
        %s282 = scalar_lea.sflag [#allocation4], %s281
        %s283 = sand.u32 %s163, 1
        %s284 = smul.addr %s283, 128
        %s285 = scalar_lea.vmem [#allocation7], %s284
        %s286 = smul.u32 8, %s24
        %s287 = smul.u32 8, %s24
        %v289 = vld [vmem:[%s5] sm:$0xff]
        %v290 = vld [vmem:[%s5 + $0x8] sm:$0xff]
        %v291 = vld [vmem:[%s253] sm:$0xff]
        %v292 = vld [vmem:[%s253 + $0x8] sm:$0xff]
        %v293 = vld [vmem:[%s253 + $0x10] sm:$0xff]
        %v294 = vld [vmem:[%s253 + $0x18] sm:$0xff]
        %v295 = vld [vmem:[%s253 + $0x20] sm:$0xff]
        %v296 = vld [vmem:[%s253 + $0x28] sm:$0xff]
        %v297 = vld [vmem:[%s253 + $0x30] sm:$0xff]
        %v298 = vld [vmem:[%s253 + $0x38] sm:$0xff]
        %v299 = vld [vmem:[%s253 + $0x40] sm:$0xff]
        %v300 = vld [vmem:[%s253 + $0x48] sm:$0xff]
        %v301 = vld [vmem:[%s253 + $0x50] sm:$0xff]
        %v302 = vld [vmem:[%s253 + $0x58] sm:$0xff]
        %v303 = vld [vmem:[%s253 + $0x60] sm:$0xff]
        %v304 = vld [vmem:[%s253 + $0x68] sm:$0xff]
        %v305 = vld [vmem:[%s253 + $0x70] sm:$0xff]
        %v306 = vld [vmem:[%s253 + $0x78] sm:$0xff]
        %307 = vadd.xlane.f32.xlu0 %v291
        %v308 = vpop.xlane.xlu0 %307
        %309 = vadd.xlane.f32.xlu0 %v292
        %v310 = vpop.xlane.xlu0 %309
        %311 = vadd.xlane.f32.xlu0 %v293
        %v312 = vpop.xlane.xlu0 %311
        %313 = vadd.xlane.f32.xlu0 %v294
        %v314 = vpop.xlane.xlu0 %313
        %315 = vadd.xlane.f32.xlu0 %v295
        %v316 = vpop.xlane.xlu0 %315
        %317 = vadd.xlane.f32.xlu0 %v296
        %v318 = vpop.xlane.xlu0 %317
        %319 = vadd.xlane.f32.xlu0 %v297
        %v320 = vpop.xlane.xlu0 %319
        %321 = vadd.xlane.f32.xlu0 %v298
        %v322 = vpop.xlane.xlu0 %321
        %323 = vadd.xlane.f32.xlu0 %v299
        %v324 = vpop.xlane.xlu0 %323
        %325 = vadd.xlane.f32.xlu0 %v300
        %v326 = vpop.xlane.xlu0 %325
        %327 = vadd.xlane.f32.xlu0 %v301
        %v328 = vpop.xlane.xlu0 %327
        %329 = vadd.xlane.f32.xlu0 %v302
        %v330 = vpop.xlane.xlu0 %329
        %331 = vadd.xlane.f32.xlu0 %v303
        %v332 = vpop.xlane.xlu0 %331
        %333 = vadd.xlane.f32.xlu0 %v304
        %v334 = vpop.xlane.xlu0 %333
        %335 = vadd.xlane.f32.xlu0 %v305
        %v336 = vpop.xlane.xlu0 %335
        %337 = vadd.xlane.f32.xlu0 %v306
        %v338 = vpop.xlane.xlu0 %337
        %v339 = vrcp.pop 128.0
        %v340 = vmul.f32 %v308, %v339
        %v341 = vmul.f32 %v310, %v339
        %v342 = vmul.f32 %v312, %v339
        %v343 = vmul.f32 %v314, %v339
        %v344 = vmul.f32 %v316, %v339
        %v345 = vmul.f32 %v318, %v339
        %v346 = vmul.f32 %v320, %v339
        %v347 = vmul.f32 %v322, %v339
        %v348 = vmul.f32 %v324, %v339
        %v349 = vmul.f32 %v326, %v339
        %v350 = vmul.f32 %v328, %v339
        %v351 = vmul.f32 %v330, %v339
        %v352 = vmul.f32 %v332, %v339
        %v353 = vmul.f32 %v334, %v339
        %v354 = vmul.f32 %v336, %v339
        %v355 = vmul.f32 %v338, %v339
        %v356 = vsub.f32 %v291, %v340
        %v357 = vsub.f32 %v292, %v341
        %v358 = vsub.f32 %v293, %v342
        %v359 = vsub.f32 %v294, %v343
        %v360 = vsub.f32 %v295, %v344
        %v361 = vsub.f32 %v296, %v345
        %v362 = vsub.f32 %v297, %v346
        %v363 = vsub.f32 %v298, %v347
        %v364 = vsub.f32 %v299, %v348
        %v365 = vsub.f32 %v300, %v349
        %v366 = vsub.f32 %v301, %v350
        %v367 = vsub.f32 %v302, %v351
        %v368 = vsub.f32 %v303, %v352
        %v369 = vsub.f32 %v304, %v353
        %v370 = vsub.f32 %v305, %v354
        %v371 = vsub.f32 %v306, %v355
        %v372 = vmul.f32 %v356, %v356
        %v373 = vmul.f32 %v357, %v357
        %v374 = vmul.f32 %v358, %v358
        %v375 = vmul.f32 %v359, %v359
        %v376 = vmul.f32 %v360, %v360
        %v377 = vmul.f32 %v361, %v361
        %v378 = vmul.f32 %v362, %v362
        %v379 = vmul.f32 %v363, %v363
        %v380 = vmul.f32 %v364, %v364
        %v381 = vmul.f32 %v365, %v365
        %v382 = vmul.f32 %v366, %v366
        %v383 = vmul.f32 %v367, %v367
        %v384 = vmul.f32 %v368, %v368
        %v385 = vmul.f32 %v369, %v369
        %v386 = vmul.f32 %v370, %v370
        %v387 = vmul.f32 %v371, %v371
        %388 = vadd.xlane.f32.xlu0 %v372
        %v389 = vpop.xlane.xlu0 %388
        %390 = vadd.xlane.f32.xlu0 %v373
        %v391 = vpop.xlane.xlu0 %390
        %392 = vadd.xlane.f32.xlu0 %v374
        %v393 = vpop.xlane.xlu0 %392
        %394 = vadd.xlane.f32.xlu0 %v375
        %v395 = vpop.xlane.xlu0 %394
        %396 = vadd.xlane.f32.xlu0 %v376
        %v397 = vpop.xlane.xlu0 %396
        %398 = vadd.xlane.f32.xlu0 %v377
        %v399 = vpop.xlane.xlu0 %398
        %400 = vadd.xlane.f32.xlu0 %v378
        %v401 = vpop.xlane.xlu0 %400
        %402 = vadd.xlane.f32.xlu0 %v379
        %v403 = vpop.xlane.xlu0 %402
        %404 = vadd.xlane.f32.xlu0 %v380
        %v405 = vpop.xlane.xlu0 %404
        %406 = vadd.xlane.f32.xlu0 %v381
        %v407 = vpop.xlane.xlu0 %406
        %408 = vadd.xlane.f32.xlu0 %v382
        %v409 = vpop.xlane.xlu0 %408
        %410 = vadd.xlane.f32.xlu0 %v383
        %v411 = vpop.xlane.xlu0 %410
        %412 = vadd.xlane.f32.xlu0 %v384
        %v413 = vpop.xlane.xlu0 %412
        %414 = vadd.xlane.f32.xlu0 %v385
        %v415 = vpop.xlane.xlu0 %414
        %416 = vadd.xlane.f32.xlu0 %v386
        %v417 = vpop.xlane.xlu0 %416
        %418 = vadd.xlane.f32.xlu0 %v387
        %v419 = vpop.xlane.xlu0 %418
        %v420 = vmul.f32 %v389, %v339
        %v421 = vmul.f32 %v391, %v339
        %v422 = vmul.f32 %v393, %v339
        %v423 = vmul.f32 %v395, %v339
        %v424 = vmul.f32 %v397, %v339
        %v425 = vmul.f32 %v399, %v339
        %v426 = vmul.f32 %v401, %v339
        %v427 = vmul.f32 %v403, %v339
        %v428 = vmul.f32 %v405, %v339
        %v429 = vmul.f32 %v407, %v339
        %v430 = vmul.f32 %v409, %v339
        %v431 = vmul.f32 %v411, %v339
        %v432 = vmul.f32 %v413, %v339
        %v433 = vmul.f32 %v415, %v339
        %v434 = vmul.f32 %v417, %v339
        %v435 = vmul.f32 %v419, %v339
        %v436 = vadd.f32 %v420, 1e-12
        %v437 = vadd.f32 %v421, 1e-12
        %v438 = vadd.f32 %v422, 1e-12
        %v439 = vadd.f32 %v423, 1e-12
        %v440 = vadd.f32 %v424, 1e-12
        %v441 = vadd.f32 %v425, 1e-12
        %v442 = vadd.f32 %v426, 1e-12
        %v443 = vadd.f32 %v427, 1e-12
        %v444 = vadd.f32 %v428, 1e-12
        %v445 = vadd.f32 %v429, 1e-12
        %v446 = vadd.f32 %v430, 1e-12
        %v447 = vadd.f32 %v431, 1e-12
        %v448 = vadd.f32 %v432, 1e-12
        %v449 = vadd.f32 %v433, 1e-12
        %v450 = vadd.f32 %v434, 1e-12
        %v451 = vadd.f32 %v435, 1e-12
        %v452 = vrsqrt.pop %v436
        %v453 = vrsqrt.pop %v437
        %v454 = vrsqrt.pop %v438
        %v455 = vrsqrt.pop %v439
        %v456 = vrsqrt.pop %v440
        %v457 = vrsqrt.pop %v441
        %v458 = vrsqrt.pop %v442
        %v459 = vrsqrt.pop %v443
        %v460 = vrsqrt.pop %v444
        %v461 = vrsqrt.pop %v445
        %v462 = vrsqrt.pop %v446
        %v463 = vrsqrt.pop %v447
        %v464 = vrsqrt.pop %v448
        %v465 = vrsqrt.pop %v449
        %v466 = vrsqrt.pop %v450
        %v467 = vrsqrt.pop %v451
        %v468 = vmul.f32 %v356, %v452
        %v469 = vmul.f32 %v357, %v453
        %v470 = vmul.f32 %v358, %v454
        %v471 = vmul.f32 %v359, %v455
        %v472 = vmul.f32 %v360, %v456
        %v473 = vmul.f32 %v361, %v457
        %v474 = vmul.f32 %v362, %v458
        %v475 = vmul.f32 %v363, %v459
        %v476 = vmul.f32 %v364, %v460
        %v477 = vmul.f32 %v365, %v461
        %v478 = vmul.f32 %v366, %v462
        %v479 = vmul.f32 %v367, %v463
        %v480 = vmul.f32 %v368, %v464
        %v481 = vmul.f32 %v369, %v465
        %v482 = vmul.f32 %v370, %v466
        %v483 = vmul.f32 %v371, %v467
        %v484 = vlaneseq
        %v485 = vshrl.u32 %v484, 7
        %v486 = vsub.s32 0, %v485
        %v487 = vrot.slane %v289, %v486
        %v488 = vmul.f32 %v487, %v468
        %v489 = vmul.f32 %v487, %v469
        %v490 = vmul.f32 %v487, %v470
        %v491 = vmul.f32 %v487, %v471
        %v492 = vmul.f32 %v487, %v472
        %v493 = vmul.f32 %v487, %v473
        %v494 = vmul.f32 %v487, %v474
        %v495 = vmul.f32 %v487, %v475
        %v496 = vmul.f32 %v487, %v476
        %v497 = vmul.f32 %v487, %v477
        %v498 = vmul.f32 %v487, %v478
        %v499 = vmul.f32 %v487, %v479
        %v500 = vmul.f32 %v487, %v480
        %v501 = vmul.f32 %v487, %v481
        %v502 = vmul.f32 %v487, %v482
        %v503 = vmul.f32 %v487, %v483
        %v504 = vlaneseq
        %v505 = vshrl.u32 %v504, 7
        %v506 = vsub.s32 1, %v505
        %v507 = vrot.slane %v289, %v506
        %v508 = vadd.f32 %v488, %v507
        %v509 = vadd.f32 %v489, %v507
        %v510 = vadd.f32 %v490, %v507
        %v511 = vadd.f32 %v491, %v507
        %v512 = vadd.f32 %v492, %v507
        %v513 = vadd.f32 %v493, %v507
        %v514 = vadd.f32 %v494, %v507
        %v515 = vadd.f32 %v495, %v507
        %v516 = vadd.f32 %v496, %v507
        %v517 = vadd.f32 %v497, %v507
        %v518 = vadd.f32 %v498, %v507
        %v519 = vadd.f32 %v499, %v507
        %v520 = vadd.f32 %v500, %v507
        %v521 = vadd.f32 %v501, %v507
        %v522 = vadd.f32 %v502, %v507
        %v523 = vadd.f32 %v503, %v507
        %v524 = vmax.f32 %v508, 0.0
        %v525 = vmax.f32 %v509, 0.0
        %v526 = vmax.f32 %v510, 0.0
        %v527 = vmax.f32 %v511, 0.0
        %v528 = vmax.f32 %v512, 0.0
        %v529 = vmax.f32 %v513, 0.0
        %v530 = vmax.f32 %v514, 0.0
        %v531 = vmax.f32 %v515, 0.0
        %v532 = vmax.f32 %v516, 0.0
        %v533 = vmax.f32 %v517, 0.0
        %v534 = vmax.f32 %v518, 0.0
        %v535 = vmax.f32 %v519, 0.0
        %v536 = vmax.f32 %v520, 0.0
        %v537 = vmax.f32 %v521, 0.0
        %v538 = vmax.f32 %v522, 0.0
        %v539 = vmax.f32 %v523, 0.0
        %v540 = vpack.c.bf16 %v525, %v524
        %v541 = vpack.c.bf16 %v527, %v526
        %v542 = vpack.c.bf16 %v529, %v528
        %v543 = vpack.c.bf16 %v531, %v530
        %v544 = vpack.c.bf16 %v533, %v532
        %v545 = vpack.c.bf16 %v535, %v534
        %v546 = vpack.c.bf16 %v537, %v536
        %v547 = vpack.c.bf16 %v539, %v538
        %v548 = vld [vmem:[%s2] sm:$0xf]
        %v549 = vld [vmem:[%s2 + $0x4] sm:$0xf]
        %v550 = vld [vmem:[%s2 + $0x8] sm:$0xf]
        %v551 = vld [vmem:[%s2 + $0xc] sm:$0xf]
        %v552 = vld [vmem:[%s2 + $0x10] sm:$0xf]
        %v553 = vld [vmem:[%s2 + $0x14] sm:$0xf]
        %v554 = vld [vmem:[%s2 + $0x18] sm:$0xf]
        %v555 = vld [vmem:[%s2 + $0x1c] sm:$0xf]
        %v556 = vld [vmem:[%s2 + $0x20] sm:$0xf]
        %v557 = vld [vmem:[%s2 + $0x24] sm:$0xf]
        %v558 = vld [vmem:[%s2 + $0x28] sm:$0xf]
        %v559 = vld [vmem:[%s2 + $0x2c] sm:$0xf]
        %v560 = vld [vmem:[%s2 + $0x30] sm:$0xf]
        %v561 = vld [vmem:[%s2 + $0x34] sm:$0xf]
        %v562 = vld [vmem:[%s2 + $0x38] sm:$0xf]
        %v563 = vld [vmem:[%s2 + $0x3c] sm:$0xf]
        %v564 = vlaneseq
        %v565 = vshrl.u32 %v564, 7
        %v566 = vsub.s32 2, %v565
        %v567 = vrot.slane %v289, %v566
        %v584 = vunpack.c.l.b16 %v548
        %v585 = vunpack.c.l.b16 %v549
        %v586 = vunpack.c.l.b16 %v550
        %v587 = vunpack.c.l.b16 %v551
        %v588 = vunpack.c.l.b16 %v552
        %v589 = vunpack.c.l.b16 %v553
        %v590 = vunpack.c.l.b16 %v554
        %v591 = vunpack.c.l.b16 %v555
        %v592 = vunpack.c.l.b16 %v556
        %v593 = vunpack.c.l.b16 %v557
        %v594 = vunpack.c.l.b16 %v558
        %v595 = vunpack.c.l.b16 %v559
        %v596 = vunpack.c.l.b16 %v560
        %v597 = vunpack.c.l.b16 %v561
        %v598 = vunpack.c.l.b16 %v562
        %v599 = vunpack.c.l.b16 %v563
        %v600 = vpack.c.b16 %v585, %v584
        %v601 = vpack.c.b16 %v587, %v586
        %v602 = vpack.c.b16 %v589, %v588
        %v603 = vpack.c.b16 %v591, %v590
        %v604 = vpack.c.b16 %v593, %v592
        %v605 = vpack.c.b16 %v595, %v594
        %v606 = vpack.c.b16 %v597, %v596
        %v607 = vpack.c.b16 %v599, %v598
        %616 = vmatprep.subr.bf16.mxu0 0
        %617 = vmatpush1.bf16.msra.mxu0 %v600
        %618 = vmatprep.subr.bf16.mxu0 0
        %619 = vmatpush1.bf16.msra.mxu0 %v601
        %620 = vmatprep.subr.bf16.mxu0 0
        %621 = vmatpush1.bf16.msra.mxu0 %v602
        %622 = vmatprep.subr.bf16.mxu0 0
        %623 = vmatpush1.bf16.msra.mxu0 %v603
        %624 = vmatprep.subr.bf16.mxu0 0
        %625 = vmatpush1.bf16.msra.mxu0 %v604
        %626 = vmatprep.subr.bf16.mxu0 0
        %627 = vmatpush1.bf16.msra.mxu0 %v605
        %628 = vmatprep.subr.bf16.mxu0 0
        %629 = vmatpush1.bf16.msra.mxu0 %v606
        %630 = vmatprep.subr.bf16.mxu0 0
        %631 = vmatpush1.bf16.msra.mxu0 %v607
        %632 = vmatprep.subr.bf16.mxu0 0
        %633 = vmatpush1.bf16.msra.mxu0 0
        %634 = vmatprep.subr.bf16.mxu0 0
        %635 = vmatpush1.bf16.msra.mxu0 0
        %636 = vmatprep.subr.bf16.mxu0 0
        %637 = vmatpush1.bf16.msra.mxu0 0
        %638 = vmatprep.subr.bf16.mxu0 0
        %639 = vmatpush1.bf16.msra.mxu0 0
        %640 = vmatprep.subr.bf16.mxu0 0
        %641 = vmatpush1.bf16.msra.mxu0 0
        %642 = vmatprep.subr.bf16.mxu0 0
        %643 = vmatpush1.bf16.msra.mxu0 0
        %644 = vmatprep.subr.bf16.mxu0 0
        %645 = vmatpush1.bf16.msra.mxu0 0
        %646 = vmatprep.subr.bf16.mxu0 0
        %647 = vmatpush1.bf16.msra.mxu0 0
        %648 = vmatprep.mubr.bf16.mxu0 0
        %649 = vmatmul.mubr.bf16.gmra.mrb[0].mxu0 %v540
        %v650 = vpop.f32.mrb[0].mxu0
        %v651 = vadd.f32 %v567, %v650
        %v652 = vpop.f32.mrb[0].mxu0
        %v653 = vpop.f32.mrb[0].mxu0
        %v654 = vadd.f32 %v567, %v653
        %v655 = vpop.f32.mrb[0].mxu0
        %656 = vmatprep.mubr.bf16.mxu0 0
        %657 = vmatmul.mubr.bf16.gmra.mrb[0].mxu0 %v541
        %v658 = vpop.f32.mrb[0].mxu0
        %v659 = vadd.f32 %v567, %v658
        %v660 = vpop.f32.mrb[0].mxu0
        %v661 = vpop.f32.mrb[0].mxu0
        %v662 = vadd.f32 %v567, %v661
        %v663 = vpop.f32.mrb[0].mxu0
        %664 = vmatprep.mubr.bf16.mxu0 0
        %665 = vmatmul.mubr.bf16.gmra.mrb[0].mxu0 %v542
        %v666 = vpop.f32.mrb[0].mxu0
        %v667 = vadd.f32 %v567, %v666
        %v668 = vpop.f32.mrb[0].mxu0
        %v669 = vpop.f32.mrb[0].mxu0
        %v670 = vadd.f32 %v567, %v669
        %v671 = vpop.f32.mrb[0].mxu0
        %672 = vmatprep.mubr.bf16.mxu0 0
        %673 = vmatmul.mubr.bf16.gmra.mrb[0].mxu0 %v543
        %v674 = vpop.f32.mrb[0].mxu0
        %v675 = vadd.f32 %v567, %v674
        %v676 = vpop.f32.mrb[0].mxu0
        %v677 = vpop.f32.mrb[0].mxu0
        %v678 = vadd.f32 %v567, %v677
        %v679 = vpop.f32.mrb[0].mxu0
        %680 = vmatprep.mubr.bf16.mxu0 0
        %681 = vmatmul.mubr.bf16.gmra.mrb[0].mxu0 %v544
        %v682 = vpop.f32.mrb[0].mxu0
        %v683 = vadd.f32 %v567, %v682
        %v684 = vpop.f32.mrb[0].mxu0
        %v685 = vpop.f32.mrb[0].mxu0
        %v686 = vadd.f32 %v567, %v685
        %v687 = vpop.f32.mrb[0].mxu0
        %688 = vmatprep.mubr.bf16.mxu0 0
        %689 = vmatmul.mubr.bf16.gmra.mrb[0].mxu0 %v545
        %v690 = vpop.f32.mrb[0].mxu0
        %v691 = vadd.f32 %v567, %v690
        %v692 = vpop.f32.mrb[0].mxu0
        %v693 = vpop.f32.mrb[0].mxu0
        %v694 = vadd.f32 %v567, %v693
        %v695 = vpop.f32.mrb[0].mxu0
        %696 = vmatprep.mubr.bf16.mxu0 0
        %697 = vmatmul.mubr.bf16.gmra.mrb[0].mxu0 %v546
        %v698 = vpop.f32.mrb[0].mxu0
        %v699 = vadd.f32 %v567, %v698
        %v700 = vpop.f32.mrb[0].mxu0
        %v701 = vpop.f32.mrb[0].mxu0
        %v702 = vadd.f32 %v567, %v701
        %v703 = vpop.f32.mrb[0].mxu0
        %704 = vmatprep.mubr.bf16.mxu0 0
        %705 = vmatmul.mubr.bf16.gmra.mrb[0].mxu0 %v547
        %v706 = vpop.f32.mrb[0].mxu0
        %v707 = vadd.f32 %v567, %v706
        %v708 = vpop.f32.mrb[0].mxu0
        %v709 = vpop.f32.mrb[0].mxu0
        %v710 = vadd.f32 %v567, %v709
        %v711 = vpop.f32.mrb[0].mxu0
        %712 = vdwg.mxu0
        %vm713 = vcmask 523264
        %v714 = vsel %vm713, %v651, 0.0
        %715 = vadd.xlane.f32.xlu0 %v714
        %v716 = vpop.xlane.xlu0 %715
        %v717 = vsel %vm713, %v654, 0.0
        %718 = vadd.xlane.f32.xlu0 %v717
        %v719 = vpop.xlane.xlu0 %718
        %v720 = vsel %vm713, %v659, 0.0
        %721 = vadd.xlane.f32.xlu0 %v720
        %v722 = vpop.xlane.xlu0 %721
        %v723 = vsel %vm713, %v662, 0.0
        %724 = vadd.xlane.f32.xlu0 %v723
        %v725 = vpop.xlane.xlu0 %724
        %v726 = vsel %vm713, %v667, 0.0
        %727 = vadd.xlane.f32.xlu0 %v726
        %v728 = vpop.xlane.xlu0 %727
        %v729 = vsel %vm713, %v670, 0.0
        %730 = vadd.xlane.f32.xlu0 %v729
        %v731 = vpop.xlane.xlu0 %730
        %v732 = vsel %vm713, %v675, 0.0
        %733 = vadd.xlane.f32.xlu0 %v732
        %v734 = vpop.xlane.xlu0 %733
        %v735 = vsel %vm713, %v678, 0.0
        %736 = vadd.xlane.f32.xlu0 %v735
        %v737 = vpop.xlane.xlu0 %736
        %v738 = vsel %vm713, %v683, 0.0
        %739 = vadd.xlane.f32.xlu0 %v738
        %v740 = vpop.xlane.xlu0 %739
        %v741 = vsel %vm713, %v686, 0.0
        %742 = vadd.xlane.f32.xlu0 %v741
        %v743 = vpop.xlane.xlu0 %742
        %v744 = vsel %vm713, %v691, 0.0
        %745 = vadd.xlane.f32.xlu0 %v744
        %v746 = vpop.xlane.xlu0 %745
        %v747 = vsel %vm713, %v694, 0.0
        %748 = vadd.xlane.f32.xlu0 %v747
        %v749 = vpop.xlane.xlu0 %748
        %v750 = vsel %vm713, %v699, 0.0
        %751 = vadd.xlane.f32.xlu0 %v750
        %v752 = vpop.xlane.xlu0 %751
        %v753 = vsel %vm713, %v702, 0.0
        %754 = vadd.xlane.f32.xlu0 %v753
        %v755 = vpop.xlane.xlu0 %754
        %v756 = vsel %vm713, %v707, 0.0
        %757 = vadd.xlane.f32.xlu0 %v756
        %v758 = vpop.xlane.xlu0 %757
        %v759 = vsel %vm713, %v710, 0.0
        %760 = vadd.xlane.f32.xlu0 %v759
        %v761 = vpop.xlane.xlu0 %760
        %v762 = vrcp.pop 64.0
        %v763 = vmul.f32 %v716, %v762
        %v764 = vmul.f32 %v719, %v762
        %v765 = vmul.f32 %v722, %v762
        %v766 = vmul.f32 %v725, %v762
        %v767 = vmul.f32 %v728, %v762
        %v768 = vmul.f32 %v731, %v762
        %v769 = vmul.f32 %v734, %v762
        %v770 = vmul.f32 %v737, %v762
        %v771 = vmul.f32 %v740, %v762
        %v772 = vmul.f32 %v743, %v762
        %v773 = vmul.f32 %v746, %v762
        %v774 = vmul.f32 %v749, %v762
        %v775 = vmul.f32 %v752, %v762
        %v776 = vmul.f32 %v755, %v762
        %v777 = vmul.f32 %v758, %v762
        %v778 = vmul.f32 %v761, %v762
        %v779 = vsub.f32 %v651, %v763
        %v780 = vsub.f32 %v654, %v764
        %v781 = vsub.f32 %v659, %v765
        %v782 = vsub.f32 %v662, %v766
        %v783 = vsub.f32 %v667, %v767
        %v784 = vsub.f32 %v670, %v768
        %v785 = vsub.f32 %v675, %v769
        %v786 = vsub.f32 %v678, %v770
        %v787 = vsub.f32 %v683, %v771
        %v788 = vsub.f32 %v686, %v772
        %v789 = vsub.f32 %v691, %v773
        %v790 = vsub.f32 %v694, %v774
        %v791 = vsub.f32 %v699, %v775
        %v792 = vsub.f32 %v702, %v776
        %v793 = vsub.f32 %v707, %v777
        %v794 = vsub.f32 %v710, %v778
        %v795 = vmul.f32 %v779, %v779
        %v796 = vmul.f32 %v780, %v780
        %v797 = vmul.f32 %v781, %v781
        %v798 = vmul.f32 %v782, %v782
        %v799 = vmul.f32 %v783, %v783
        %v800 = vmul.f32 %v784, %v784
        %v801 = vmul.f32 %v785, %v785
        %v802 = vmul.f32 %v786, %v786
        %v803 = vmul.f32 %v787, %v787
        %v804 = vmul.f32 %v788, %v788
        %v805 = vmul.f32 %v789, %v789
        %v806 = vmul.f32 %v790, %v790
        %v807 = vmul.f32 %v791, %v791
        %v808 = vmul.f32 %v792, %v792
        %v809 = vmul.f32 %v793, %v793
        %v810 = vmul.f32 %v794, %v794
        %v811 = vsel %vm713, %v795, 0.0
        %812 = vadd.xlane.f32.xlu0 %v811
        %v813 = vpop.xlane.xlu0 %812
        %v814 = vsel %vm713, %v796, 0.0
        %815 = vadd.xlane.f32.xlu0 %v814
        %v816 = vpop.xlane.xlu0 %815
        %v817 = vsel %vm713, %v797, 0.0
        %818 = vadd.xlane.f32.xlu0 %v817
        %v819 = vpop.xlane.xlu0 %818
        %v820 = vsel %vm713, %v798, 0.0
        %821 = vadd.xlane.f32.xlu0 %v820
        %v822 = vpop.xlane.xlu0 %821
        %v823 = vsel %vm713, %v799, 0.0
        %824 = vadd.xlane.f32.xlu0 %v823
        %v825 = vpop.xlane.xlu0 %824
        %v826 = vsel %vm713, %v800, 0.0
        %827 = vadd.xlane.f32.xlu0 %v826
        %v828 = vpop.xlane.xlu0 %827
        %v829 = vsel %vm713, %v801, 0.0
        %830 = vadd.xlane.f32.xlu0 %v829
        %v831 = vpop.xlane.xlu0 %830
        %v832 = vsel %vm713, %v802, 0.0
        %833 = vadd.xlane.f32.xlu0 %v832
        %v834 = vpop.xlane.xlu0 %833
        %v835 = vsel %vm713, %v803, 0.0
        %836 = vadd.xlane.f32.xlu0 %v835
        %v837 = vpop.xlane.xlu0 %836
        %v838 = vsel %vm713, %v804, 0.0
        %839 = vadd.xlane.f32.xlu0 %v838
        %v840 = vpop.xlane.xlu0 %839
        %v841 = vsel %vm713, %v805, 0.0
        %842 = vadd.xlane.f32.xlu0 %v841
        %v843 = vpop.xlane.xlu0 %842
        %v844 = vsel %vm713, %v806, 0.0
        %845 = vadd.xlane.f32.xlu0 %v844
        %v846 = vpop.xlane.xlu0 %845
        %v847 = vsel %vm713, %v807, 0.0
        %848 = vadd.xlane.f32.xlu0 %v847
        %v849 = vpop.xlane.xlu0 %848
        %v850 = vsel %vm713, %v808, 0.0
        %851 = vadd.xlane.f32.xlu0 %v850
        %v852 = vpop.xlane.xlu0 %851
        %v853 = vsel %vm713, %v809, 0.0
        %854 = vadd.xlane.f32.xlu0 %v853
        %v855 = vpop.xlane.xlu0 %854
        %v856 = vsel %vm713, %v810, 0.0
        %857 = vadd.xlane.f32.xlu0 %v856
        %v858 = vpop.xlane.xlu0 %857
        %v859 = vmul.f32 %v813, %v762
        %v860 = vmul.f32 %v816, %v762
        %v861 = vmul.f32 %v819, %v762
        %v862 = vmul.f32 %v822, %v762
        %v863 = vmul.f32 %v825, %v762
        %v864 = vmul.f32 %v828, %v762
        %v865 = vmul.f32 %v831, %v762
        %v866 = vmul.f32 %v834, %v762
        %v867 = vmul.f32 %v837, %v762
        %v868 = vmul.f32 %v840, %v762
        %v869 = vmul.f32 %v843, %v762
        %v870 = vmul.f32 %v846, %v762
        %v871 = vmul.f32 %v849, %v762
        %v872 = vmul.f32 %v852, %v762
        %v873 = vmul.f32 %v855, %v762
        %v874 = vmul.f32 %v858, %v762
        %v875 = vadd.f32 %v859, 1e-12
        %v876 = vadd.f32 %v860, 1e-12
        %v877 = vadd.f32 %v861, 1e-12
        %v878 = vadd.f32 %v862, 1e-12
        %v879 = vadd.f32 %v863, 1e-12
        %v880 = vadd.f32 %v864, 1e-12
        %v881 = vadd.f32 %v865, 1e-12
        %v882 = vadd.f32 %v866, 1e-12
        %v883 = vadd.f32 %v867, 1e-12
        %v884 = vadd.f32 %v868, 1e-12
        %v885 = vadd.f32 %v869, 1e-12
        %v886 = vadd.f32 %v870, 1e-12
        %v887 = vadd.f32 %v871, 1e-12
        %v888 = vadd.f32 %v872, 1e-12
        %v889 = vadd.f32 %v873, 1e-12
        %v890 = vadd.f32 %v874, 1e-12
        %v891 = vrsqrt.pop %v875
        %v892 = vrsqrt.pop %v876
        %v893 = vrsqrt.pop %v877
        %v894 = vrsqrt.pop %v878
        %v895 = vrsqrt.pop %v879
        %v896 = vrsqrt.pop %v880
        %v897 = vrsqrt.pop %v881
        %v898 = vrsqrt.pop %v882
        %v899 = vrsqrt.pop %v883
        %v900 = vrsqrt.pop %v884
        %v901 = vrsqrt.pop %v885
        %v902 = vrsqrt.pop %v886
        %v903 = vrsqrt.pop %v887
        %v904 = vrsqrt.pop %v888
        %v905 = vrsqrt.pop %v889
        %v906 = vrsqrt.pop %v890
        %v907 = vmul.f32 %v779, %v891
        %v908 = vmul.f32 %v780, %v892
        %v909 = vmul.f32 %v781, %v893
        %v910 = vmul.f32 %v782, %v894
        %v911 = vmul.f32 %v783, %v895
        %v912 = vmul.f32 %v784, %v896
        %v913 = vmul.f32 %v785, %v897
        %v914 = vmul.f32 %v786, %v898
        %v915 = vmul.f32 %v787, %v899
        %v916 = vmul.f32 %v788, %v900
        %v917 = vmul.f32 %v789, %v901
        %v918 = vmul.f32 %v790, %v902
        %v919 = vmul.f32 %v791, %v903
        %v920 = vmul.f32 %v792, %v904
        %v921 = vmul.f32 %v793, %v905
        %v922 = vmul.f32 %v794, %v906
        %v923 = vlaneseq
        %v924 = vshrl.u32 %v923, 7
        %v925 = vsub.s32 3, %v924
        %v926 = vrot.slane %v289, %v925
        %v927 = vmul.f32 %v926, %v907
        %v928 = vmul.f32 %v926, %v908
        %v929 = vmul.f32 %v926, %v909
        %v930 = vmul.f32 %v926, %v910
        %v931 = vmul.f32 %v926, %v911
        %v932 = vmul.f32 %v926, %v912
        %v933 = vmul.f32 %v926, %v913
        %v934 = vmul.f32 %v926, %v914
        %v935 = vmul.f32 %v926, %v915
        %v936 = vmul.f32 %v926, %v916
        %v937 = vmul.f32 %v926, %v917
        %v938 = vmul.f32 %v926, %v918
        %v939 = vmul.f32 %v926, %v919
        %v940 = vmul.f32 %v926, %v920
        %v941 = vmul.f32 %v926, %v921
        %v942 = vmul.f32 %v926, %v922
        %v943 = vlaneseq
        %v944 = vshrl.u32 %v943, 7
        %v945 = vsub.s32 4, %v944
        %v946 = vrot.slane %v289, %v945
        %v947 = vadd.f32 %v927, %v946
        %v948 = vadd.f32 %v928, %v946
        %v949 = vadd.f32 %v929, %v946
        %v950 = vadd.f32 %v930, %v946
        %v951 = vadd.f32 %v931, %v946
        %v952 = vadd.f32 %v932, %v946
        %v953 = vadd.f32 %v933, %v946
        %v954 = vadd.f32 %v934, %v946
        %v955 = vadd.f32 %v935, %v946
        %v956 = vadd.f32 %v936, %v946
        %v957 = vadd.f32 %v937, %v946
        %v958 = vadd.f32 %v938, %v946
        %v959 = vadd.f32 %v939, %v946
        %v960 = vadd.f32 %v940, %v946
        %v961 = vadd.f32 %v941, %v946
        %v962 = vadd.f32 %v942, %v946
        %v963 = vmax.f32 %v947, 0.0
        %v964 = vmax.f32 %v948, 0.0
        %v965 = vmax.f32 %v949, 0.0
        %v966 = vmax.f32 %v950, 0.0
        %v967 = vmax.f32 %v951, 0.0
        %v968 = vmax.f32 %v952, 0.0
        %v969 = vmax.f32 %v953, 0.0
        %v970 = vmax.f32 %v954, 0.0
        %v971 = vmax.f32 %v955, 0.0
        %v972 = vmax.f32 %v956, 0.0
        %v973 = vmax.f32 %v957, 0.0
        %v974 = vmax.f32 %v958, 0.0
        %v975 = vmax.f32 %v959, 0.0
        %v976 = vmax.f32 %v960, 0.0
        %v977 = vmax.f32 %v961, 0.0
        %v978 = vmax.f32 %v962, 0.0
        %v979 = vpack.c.bf16 %v964, %v963
        %v980 = vpack.c.bf16 %v966, %v965
        %v981 = vpack.c.bf16 %v968, %v967
        %v982 = vpack.c.bf16 %v970, %v969
        %v983 = vpack.c.bf16 %v972, %v971
        %v984 = vpack.c.bf16 %v974, %v973
        %v985 = vpack.c.bf16 %v976, %v975
        %v986 = vpack.c.bf16 %v978, %v977
        %v987 = vld [vmem:[%s3] sm:$0xf]
        %v988 = vld [vmem:[%s3 + $0x4] sm:$0xf]
        %v989 = vld [vmem:[%s3 + $0x8] sm:$0xf]
        %v990 = vld [vmem:[%s3 + $0xc] sm:$0xf]
        %v991 = vld [vmem:[%s3 + $0x10] sm:$0xf]
        %v992 = vld [vmem:[%s3 + $0x14] sm:$0xf]
        %v993 = vld [vmem:[%s3 + $0x18] sm:$0xf]
        %v994 = vld [vmem:[%s3 + $0x1c] sm:$0xf]
        %v1003 = vunpack.c.l.b16 %v987
        %v1004 = vunpack.c.l.b16 %v988
        %v1005 = vunpack.c.l.b16 %v989
        %v1006 = vunpack.c.l.b16 %v990
        %v1007 = vunpack.c.l.b16 %v991
        %v1008 = vunpack.c.l.b16 %v992
        %v1009 = vunpack.c.l.b16 %v993
        %v1010 = vunpack.c.l.b16 %v994
        %v1011 = vpack.c.b16 %v1004, %v1003
        %v1012 = vpack.c.b16 %v1006, %v1005
        %v1013 = vpack.c.b16 %v1008, %v1007
        %v1014 = vpack.c.b16 %v1010, %v1009
        %v1020 = vsel %vm713, %v979, 0
        %v1023 = vsel %vm713, %v980, 0
        %v1026 = vsel %vm713, %v981, 0
        %v1029 = vsel %vm713, %v982, 0
        %v1032 = vsel %vm713, %v983, 0
        %v1035 = vsel %vm713, %v984, 0
        %v1038 = vsel %vm713, %v985, 0
        %v1041 = vsel %vm713, %v986, 0
        %1043 = vmatprep.subr.bf16.mxu0 0
        %1044 = vmatpush1.bf16.msra.mxu0 %v1011
        %1045 = vmatprep.subr.bf16.mxu0 0
        %1046 = vmatpush1.bf16.msra.mxu0 %v1012
        %1047 = vmatprep.subr.bf16.mxu0 0
        %1048 = vmatpush1.bf16.msra.mxu0 %v1013
        %1049 = vmatprep.subr.bf16.mxu0 0
        %1050 = vmatpush1.bf16.msra.mxu0 %v1014
        %1051 = vmatprep.subr.bf16.mxu0 0
        %1052 = vmatpush1.bf16.msra.mxu0 0
        %1053 = vmatprep.subr.bf16.mxu0 0
        %1054 = vmatpush1.bf16.msra.mxu0 0
        %1055 = vmatprep.subr.bf16.mxu0 0
        %1056 = vmatpush1.bf16.msra.mxu0 0
        %1057 = vmatprep.subr.bf16.mxu0 0
        %1058 = vmatpush1.bf16.msra.mxu0 0
        %1059 = vmatprep.subr.bf16.mxu0 0
        %1060 = vmatpush1.bf16.msra.mxu0 0
        %1061 = vmatprep.subr.bf16.mxu0 0
        %1062 = vmatpush1.bf16.msra.mxu0 0
        %1063 = vmatprep.subr.bf16.mxu0 0
        %1064 = vmatpush1.bf16.msra.mxu0 0
        %1065 = vmatprep.subr.bf16.mxu0 0
        %1066 = vmatpush1.bf16.msra.mxu0 0
        %1067 = vmatprep.subr.bf16.mxu0 0
        %1068 = vmatpush1.bf16.msra.mxu0 0
        %1069 = vmatprep.subr.bf16.mxu0 0
        %1070 = vmatpush1.bf16.msra.mxu0 0
        %1071 = vmatprep.subr.bf16.mxu0 0
        %1072 = vmatpush1.bf16.msra.mxu0 0
        %1073 = vmatprep.subr.bf16.mxu0 0
        %1074 = vmatpush1.bf16.msra.mxu0 0
        %1075 = vmatprep.mubr.bf16.mxu0 0
        %1076 = vmatmul.mubr.bf16.gmra.mrb[0].mxu0 %v1020
        %v1077 = vpop.f32.mrb[0].mxu0
        %v1078 = vadd.f32 0.0, %v1077
        %v1079 = vpop.f32.mrb[0].mxu0
        %v1080 = vpop.f32.mrb[0].mxu0
        %v1081 = vadd.f32 0.0, %v1080
        %v1082 = vpop.f32.mrb[0].mxu0
        %1083 = vmatprep.mubr.bf16.mxu0 0
        %1084 = vmatmul.mubr.bf16.gmra.mrb[0].mxu0 %v1023
        %v1085 = vpop.f32.mrb[0].mxu0
        %v1086 = vadd.f32 0.0, %v1085
        %v1087 = vpop.f32.mrb[0].mxu0
        %v1088 = vpop.f32.mrb[0].mxu0
        %v1089 = vadd.f32 0.0, %v1088
        %v1090 = vpop.f32.mrb[0].mxu0
        %1091 = vmatprep.mubr.bf16.mxu0 0
        %1092 = vmatmul.mubr.bf16.gmra.mrb[0].mxu0 %v1026
        %v1093 = vpop.f32.mrb[0].mxu0
        %v1094 = vadd.f32 0.0, %v1093
        %v1095 = vpop.f32.mrb[0].mxu0
        %v1096 = vpop.f32.mrb[0].mxu0
        %v1097 = vadd.f32 0.0, %v1096
        %v1098 = vpop.f32.mrb[0].mxu0
        %1099 = vmatprep.mubr.bf16.mxu0 0
        %1100 = vmatmul.mubr.bf16.gmra.mrb[0].mxu0 %v1029
        %v1101 = vpop.f32.mrb[0].mxu0
        %v1102 = vadd.f32 0.0, %v1101
        %v1103 = vpop.f32.mrb[0].mxu0
        %v1104 = vpop.f32.mrb[0].mxu0
        %v1105 = vadd.f32 0.0, %v1104
        %v1106 = vpop.f32.mrb[0].mxu0
        %1107 = vmatprep.mubr.bf16.mxu0 0
        %1108 = vmatmul.mubr.bf16.gmra.mrb[0].mxu0 %v1032
        %v1109 = vpop.f32.mrb[0].mxu0
        %v1110 = vadd.f32 0.0, %v1109
        %v1111 = vpop.f32.mrb[0].mxu0
        %v1112 = vpop.f32.mrb[0].mxu0
        %v1113 = vadd.f32 0.0, %v1112
        %v1114 = vpop.f32.mrb[0].mxu0
        %1115 = vmatprep.mubr.bf16.mxu0 0
        %1116 = vmatmul.mubr.bf16.gmra.mrb[0].mxu0 %v1035
        %v1117 = vpop.f32.mrb[0].mxu0
        %v1118 = vadd.f32 0.0, %v1117
        %v1119 = vpop.f32.mrb[0].mxu0
        %v1120 = vpop.f32.mrb[0].mxu0
        %v1121 = vadd.f32 0.0, %v1120
        %v1122 = vpop.f32.mrb[0].mxu0
        %1123 = vmatprep.mubr.bf16.mxu0 0
        %1124 = vmatmul.mubr.bf16.gmra.mrb[0].mxu0 %v1038
        %v1125 = vpop.f32.mrb[0].mxu0
        %v1126 = vadd.f32 0.0, %v1125
        %v1127 = vpop.f32.mrb[0].mxu0
        %v1128 = vpop.f32.mrb[0].mxu0
        %v1129 = vadd.f32 0.0, %v1128
        %v1130 = vpop.f32.mrb[0].mxu0
        %1131 = vmatprep.mubr.bf16.mxu0 0
        %1132 = vmatmul.mubr.bf16.gmra.mrb[0].mxu0 %v1041
        %v1133 = vpop.f32.mrb[0].mxu0
        %v1134 = vadd.f32 0.0, %v1133
        %v1135 = vpop.f32.mrb[0].mxu0
        %v1136 = vpop.f32.mrb[0].mxu0
        %v1137 = vadd.f32 0.0, %v1136
        %v1138 = vpop.f32.mrb[0].mxu0
        %1139 = vdwg.mxu0
        %v1140 = vld [vmem:[%s1] sm:$0xf]
        %v1141 = vld [vmem:[%s1 + $0x4] sm:$0xf]
        %v1142 = vld [vmem:[%s1 + $0x8] sm:$0xf]
        %v1143 = vld [vmem:[%s1 + $0xc] sm:$0xf]
        %v1144 = vld [vmem:[%s1 + $0x10] sm:$0xf]
        %v1145 = vld [vmem:[%s1 + $0x14] sm:$0xf]
        %v1146 = vld [vmem:[%s1 + $0x18] sm:$0xf]
        %v1147 = vld [vmem:[%s1 + $0x1c] sm:$0xf]
        %v1148 = vld [vmem:[%s1 + $0x20] sm:$0xf]
        %v1149 = vld [vmem:[%s1 + $0x24] sm:$0xf]
        %v1150 = vld [vmem:[%s1 + $0x28] sm:$0xf]
        %v1151 = vld [vmem:[%s1 + $0x2c] sm:$0xf]
        %v1152 = vld [vmem:[%s1 + $0x30] sm:$0xf]
        %v1153 = vld [vmem:[%s1 + $0x34] sm:$0xf]
        %v1154 = vld [vmem:[%s1 + $0x38] sm:$0xf]
        %v1155 = vld [vmem:[%s1 + $0x3c] sm:$0xf]
        %v1156 = vpack.c.bf16 %v1081, %v1078
        %v1157 = vpack.c.bf16 %v1089, %v1086
        %v1158 = vpack.c.bf16 %v1097, %v1094
        %v1159 = vpack.c.bf16 %v1105, %v1102
        %v1160 = vpack.c.bf16 %v1113, %v1110
        %v1161 = vpack.c.bf16 %v1121, %v1118
        %v1162 = vpack.c.bf16 %v1129, %v1126
        %v1163 = vpack.c.bf16 %v1137, %v1134
        %v1164 = vlaneseq
        %v1165 = vshrl.u32 %v1164, 7
        %v1166 = vsub.s32 5, %v1165
        %v1167 = vrot.slane %v289, %v1166
        %v1184 = vunpack.c.l.b16 %v1140
        %v1185 = vunpack.c.l.b16 %v1141
        %v1186 = vunpack.c.l.b16 %v1142
        %v1187 = vunpack.c.l.b16 %v1143
        %v1188 = vunpack.c.l.b16 %v1144
        %v1189 = vunpack.c.l.b16 %v1145
        %v1190 = vunpack.c.l.b16 %v1146
        %v1191 = vunpack.c.l.b16 %v1147
        %v1192 = vunpack.c.l.b16 %v1148
        %v1193 = vunpack.c.l.b16 %v1149
        %v1194 = vunpack.c.l.b16 %v1150
        %v1195 = vunpack.c.l.b16 %v1151
        %v1196 = vunpack.c.l.b16 %v1152
        %v1197 = vunpack.c.l.b16 %v1153
        %v1198 = vunpack.c.l.b16 %v1154
        %v1199 = vunpack.c.l.b16 %v1155
        %v1200 = vpack.c.b16 %v1185, %v1184
        %v1201 = vpack.c.b16 %v1187, %v1186
        %v1202 = vpack.c.b16 %v1189, %v1188
        %v1203 = vpack.c.b16 %v1191, %v1190
        %v1204 = vpack.c.b16 %v1193, %v1192
        %v1205 = vpack.c.b16 %v1195, %v1194
        %v1206 = vpack.c.b16 %v1197, %v1196
        %v1207 = vpack.c.b16 %v1199, %v1198
        %1216 = vmatprep.subr.bf16.mxu0 0
        %1217 = vmatpush1.bf16.msra.mxu0 %v1156
        %1218 = vmatprep.subr.bf16.mxu0 0
        %1219 = vmatpush1.bf16.msra.mxu0 %v1157
        %1220 = vmatprep.subr.bf16.mxu0 0
        %1221 = vmatpush1.bf16.msra.mxu0 %v1158
        %1222 = vmatprep.subr.bf16.mxu0 0
        %1223 = vmatpush1.bf16.msra.mxu0 %v1159
        %1224 = vmatprep.subr.bf16.mxu0 0
        %1225 = vmatpush1.bf16.msra.mxu0 %v1160
        %1226 = vmatprep.subr.bf16.mxu0 0
        %1227 = vmatpush1.bf16.msra.mxu0 %v1161
        %1228 = vmatprep.subr.bf16.mxu0 0
        %1229 = vmatpush1.bf16.msra.mxu0 %v1162
        %1230 = vmatprep.subr.bf16.mxu0 0
        %1231 = vmatpush1.bf16.msra.mxu0 %v1163
        %1232 = vmatprep.subr.bf16.mxu0 0
        %1233 = vmatpush1.bf16.msra.mxu0 0
        %1234 = vmatprep.subr.bf16.mxu0 0
        %1235 = vmatpush1.bf16.msra.mxu0 0
        %1236 = vmatprep.subr.bf16.mxu0 0
        %1237 = vmatpush1.bf16.msra.mxu0 0
        %1238 = vmatprep.subr.bf16.mxu0 0
        %1239 = vmatpush1.bf16.msra.mxu0 0
        %1240 = vmatprep.subr.bf16.mxu0 0
        %1241 = vmatpush1.bf16.msra.mxu0 0
        %1242 = vmatprep.subr.bf16.mxu0 0
        %1243 = vmatpush1.bf16.msra.mxu0 0
        %1244 = vmatprep.subr.bf16.mxu0 0
        %1245 = vmatpush1.bf16.msra.mxu0 0
        %1246 = vmatprep.subr.bf16.mxu0 0
        %1247 = vmatpush1.bf16.msra.mxu0 0
        %1248 = vmatprep.mubr.bf16.mxu0 0
        %1249 = vmatmul.mubr.bf16.gmra.mrb[0].mxu0 %v1200
        %v1250 = vpop.f32.mrb[0].mxu0
        %v1251 = vadd.f32 %v1167, %v1250
        %v1252 = vpop.f32.mrb[0].mxu0
        %v1253 = vpop.f32.mrb[0].mxu0
        %v1254 = vadd.f32 %v1167, %v1253
        %v1255 = vpop.f32.mrb[0].mxu0
        %1256 = vmatprep.mubr.bf16.mxu0 0
        %1257 = vmatmul.mubr.bf16.gmra.mrb[0].mxu0 %v1201
        %v1258 = vpop.f32.mrb[0].mxu0
        %v1259 = vadd.f32 %v1167, %v1258
        %v1260 = vpop.f32.mrb[0].mxu0
        %v1261 = vpop.f32.mrb[0].mxu0
        %v1262 = vadd.f32 %v1167, %v1261
        %v1263 = vpop.f32.mrb[0].mxu0
        %1264 = vmatprep.mubr.bf16.mxu0 0
        %1265 = vmatmul.mubr.bf16.gmra.mrb[0].mxu0 %v1202
        %v1266 = vpop.f32.mrb[0].mxu0
        %v1267 = vadd.f32 %v1167, %v1266
        %v1268 = vpop.f32.mrb[0].mxu0
        %v1269 = vpop.f32.mrb[0].mxu0
        %v1270 = vadd.f32 %v1167, %v1269
        %v1271 = vpop.f32.mrb[0].mxu0
        %1272 = vmatprep.mubr.bf16.mxu0 0
        %1273 = vmatmul.mubr.bf16.gmra.mrb[0].mxu0 %v1203
        %v1274 = vpop.f32.mrb[0].mxu0
        %v1275 = vadd.f32 %v1167, %v1274
        %v1276 = vpop.f32.mrb[0].mxu0
        %v1277 = vpop.f32.mrb[0].mxu0
        %v1278 = vadd.f32 %v1167, %v1277
        %v1279 = vpop.f32.mrb[0].mxu0
        %1280 = vmatprep.mubr.bf16.mxu0 0
        %1281 = vmatmul.mubr.bf16.gmra.mrb[0].mxu0 %v1204
        %v1282 = vpop.f32.mrb[0].mxu0
        %v1283 = vadd.f32 %v1167, %v1282
        %v1284 = vpop.f32.mrb[0].mxu0
        %v1285 = vpop.f32.mrb[0].mxu0
        %v1286 = vadd.f32 %v1167, %v1285
        %v1287 = vpop.f32.mrb[0].mxu0
        %1288 = vmatprep.mubr.bf16.mxu0 0
        %1289 = vmatmul.mubr.bf16.gmra.mrb[0].mxu0 %v1205
        %v1290 = vpop.f32.mrb[0].mxu0
        %v1291 = vadd.f32 %v1167, %v1290
        %v1292 = vpop.f32.mrb[0].mxu0
        %v1293 = vpop.f32.mrb[0].mxu0
        %v1294 = vadd.f32 %v1167, %v1293
        %v1295 = vpop.f32.mrb[0].mxu0
        %1296 = vmatprep.mubr.bf16.mxu0 0
        %1297 = vmatmul.mubr.bf16.gmra.mrb[0].mxu0 %v1206
        %v1298 = vpop.f32.mrb[0].mxu0
        %v1299 = vadd.f32 %v1167, %v1298
        %v1300 = vpop.f32.mrb[0].mxu0
        %v1301 = vpop.f32.mrb[0].mxu0
        %v1302 = vadd.f32 %v1167, %v1301
        %v1303 = vpop.f32.mrb[0].mxu0
        %1304 = vmatprep.mubr.bf16.mxu0 0
        %1305 = vmatmul.mubr.bf16.gmra.mrb[0].mxu0 %v1207
        %v1306 = vpop.f32.mrb[0].mxu0
        %v1307 = vadd.f32 %v1167, %v1306
        %v1308 = vpop.f32.mrb[0].mxu0
        %v1309 = vpop.f32.mrb[0].mxu0
        %v1310 = vadd.f32 %v1167, %v1309
        %v1311 = vpop.f32.mrb[0].mxu0
        %1312 = vdwg.mxu0
        %v1313 = vsel %vm713, %v1251, 0.0
        %1314 = vadd.xlane.f32.xlu0 %v1313
        %v1315 = vpop.xlane.xlu0 %1314
        %v1316 = vsel %vm713, %v1254, 0.0
        %1317 = vadd.xlane.f32.xlu0 %v1316
        %v1318 = vpop.xlane.xlu0 %1317
        %v1319 = vsel %vm713, %v1259, 0.0
        %1320 = vadd.xlane.f32.xlu0 %v1319
        %v1321 = vpop.xlane.xlu0 %1320
        %v1322 = vsel %vm713, %v1262, 0.0
        %1323 = vadd.xlane.f32.xlu0 %v1322
        %v1324 = vpop.xlane.xlu0 %1323
        %v1325 = vsel %vm713, %v1267, 0.0
        %1326 = vadd.xlane.f32.xlu0 %v1325
        %v1327 = vpop.xlane.xlu0 %1326
        %v1328 = vsel %vm713, %v1270, 0.0
        %1329 = vadd.xlane.f32.xlu0 %v1328
        %v1330 = vpop.xlane.xlu0 %1329
        %v1331 = vsel %vm713, %v1275, 0.0
        %1332 = vadd.xlane.f32.xlu0 %v1331
        %v1333 = vpop.xlane.xlu0 %1332
        %v1334 = vsel %vm713, %v1278, 0.0
        %1335 = vadd.xlane.f32.xlu0 %v1334
        %v1336 = vpop.xlane.xlu0 %1335
        %v1337 = vsel %vm713, %v1283, 0.0
        %1338 = vadd.xlane.f32.xlu0 %v1337
        %v1339 = vpop.xlane.xlu0 %1338
        %v1340 = vsel %vm713, %v1286, 0.0
        %1341 = vadd.xlane.f32.xlu0 %v1340
        %v1342 = vpop.xlane.xlu0 %1341
        %v1343 = vsel %vm713, %v1291, 0.0
        %1344 = vadd.xlane.f32.xlu0 %v1343
        %v1345 = vpop.xlane.xlu0 %1344
        %v1346 = vsel %vm713, %v1294, 0.0
        %1347 = vadd.xlane.f32.xlu0 %v1346
        %v1348 = vpop.xlane.xlu0 %1347
        %v1349 = vsel %vm713, %v1299, 0.0
        %1350 = vadd.xlane.f32.xlu0 %v1349
        %v1351 = vpop.xlane.xlu0 %1350
        %v1352 = vsel %vm713, %v1302, 0.0
        %1353 = vadd.xlane.f32.xlu0 %v1352
        %v1354 = vpop.xlane.xlu0 %1353
        %v1355 = vsel %vm713, %v1307, 0.0
        %1356 = vadd.xlane.f32.xlu0 %v1355
        %v1357 = vpop.xlane.xlu0 %1356
        %v1358 = vsel %vm713, %v1310, 0.0
        %1359 = vadd.xlane.f32.xlu0 %v1358
        %v1360 = vpop.xlane.xlu0 %1359
        %v1361 = vmul.f32 %v1315, %v762
        %v1362 = vmul.f32 %v1318, %v762
        %v1363 = vmul.f32 %v1321, %v762
        %v1364 = vmul.f32 %v1324, %v762
        %v1365 = vmul.f32 %v1327, %v762
        %v1366 = vmul.f32 %v1330, %v762
        %v1367 = vmul.f32 %v1333, %v762
        %v1368 = vmul.f32 %v1336, %v762
        %v1369 = vmul.f32 %v1339, %v762
        %v1370 = vmul.f32 %v1342, %v762
        %v1371 = vmul.f32 %v1345, %v762
        %v1372 = vmul.f32 %v1348, %v762
        %v1373 = vmul.f32 %v1351, %v762
        %v1374 = vmul.f32 %v1354, %v762
        %v1375 = vmul.f32 %v1357, %v762
        %v1376 = vmul.f32 %v1360, %v762
        %v1377 = vsub.f32 %v1251, %v1361
        %v1378 = vsub.f32 %v1254, %v1362
        %v1379 = vsub.f32 %v1259, %v1363
        %v1380 = vsub.f32 %v1262, %v1364
        %v1381 = vsub.f32 %v1267, %v1365
        %v1382 = vsub.f32 %v1270, %v1366
        %v1383 = vsub.f32 %v1275, %v1367
        %v1384 = vsub.f32 %v1278, %v1368
        %v1385 = vsub.f32 %v1283, %v1369
        %v1386 = vsub.f32 %v1286, %v1370
        %v1387 = vsub.f32 %v1291, %v1371
        %v1388 = vsub.f32 %v1294, %v1372
        %v1389 = vsub.f32 %v1299, %v1373
        %v1390 = vsub.f32 %v1302, %v1374
        %v1391 = vsub.f32 %v1307, %v1375
        %v1392 = vsub.f32 %v1310, %v1376
        %v1393 = vmul.f32 %v1377, %v1377
        %v1394 = vmul.f32 %v1378, %v1378
        %v1395 = vmul.f32 %v1379, %v1379
        %v1396 = vmul.f32 %v1380, %v1380
        %v1397 = vmul.f32 %v1381, %v1381
        %v1398 = vmul.f32 %v1382, %v1382
        %v1399 = vmul.f32 %v1383, %v1383
        %v1400 = vmul.f32 %v1384, %v1384
        %v1401 = vmul.f32 %v1385, %v1385
        %v1402 = vmul.f32 %v1386, %v1386
        %v1403 = vmul.f32 %v1387, %v1387
        %v1404 = vmul.f32 %v1388, %v1388
        %v1405 = vmul.f32 %v1389, %v1389
        %v1406 = vmul.f32 %v1390, %v1390
        %v1407 = vmul.f32 %v1391, %v1391
        %v1408 = vmul.f32 %v1392, %v1392
        %v1409 = vsel %vm713, %v1393, 0.0
        %1410 = vadd.xlane.f32.xlu0 %v1409
        %v1411 = vpop.xlane.xlu0 %1410
        %v1412 = vsel %vm713, %v1394, 0.0
        %1413 = vadd.xlane.f32.xlu0 %v1412
        %v1414 = vpop.xlane.xlu0 %1413
        %v1415 = vsel %vm713, %v1395, 0.0
        %1416 = vadd.xlane.f32.xlu0 %v1415
        %v1417 = vpop.xlane.xlu0 %1416
        %v1418 = vsel %vm713, %v1396, 0.0
        %1419 = vadd.xlane.f32.xlu0 %v1418
        %v1420 = vpop.xlane.xlu0 %1419
        %v1421 = vsel %vm713, %v1397, 0.0
        %1422 = vadd.xlane.f32.xlu0 %v1421
        %v1423 = vpop.xlane.xlu0 %1422
        %v1424 = vsel %vm713, %v1398, 0.0
        %1425 = vadd.xlane.f32.xlu0 %v1424
        %v1426 = vpop.xlane.xlu0 %1425
        %v1427 = vsel %vm713, %v1399, 0.0
        %1428 = vadd.xlane.f32.xlu0 %v1427
        %v1429 = vpop.xlane.xlu0 %1428
        %v1430 = vsel %vm713, %v1400, 0.0
        %1431 = vadd.xlane.f32.xlu0 %v1430
        %v1432 = vpop.xlane.xlu0 %1431
        %v1433 = vsel %vm713, %v1401, 0.0
        %1434 = vadd.xlane.f32.xlu0 %v1433
        %v1435 = vpop.xlane.xlu0 %1434
        %v1436 = vsel %vm713, %v1402, 0.0
        %1437 = vadd.xlane.f32.xlu0 %v1436
        %v1438 = vpop.xlane.xlu0 %1437
        %v1439 = vsel %vm713, %v1403, 0.0
        %1440 = vadd.xlane.f32.xlu0 %v1439
        %v1441 = vpop.xlane.xlu0 %1440
        %v1442 = vsel %vm713, %v1404, 0.0
        %1443 = vadd.xlane.f32.xlu0 %v1442
        %v1444 = vpop.xlane.xlu0 %1443
        %v1445 = vsel %vm713, %v1405, 0.0
        %1446 = vadd.xlane.f32.xlu0 %v1445
        %v1447 = vpop.xlane.xlu0 %1446
        %v1448 = vsel %vm713, %v1406, 0.0
        %1449 = vadd.xlane.f32.xlu0 %v1448
        %v1450 = vpop.xlane.xlu0 %1449
        %v1451 = vsel %vm713, %v1407, 0.0
        %1452 = vadd.xlane.f32.xlu0 %v1451
        %v1453 = vpop.xlane.xlu0 %1452
        %v1454 = vsel %vm713, %v1408, 0.0
        %1455 = vadd.xlane.f32.xlu0 %v1454
        %v1456 = vpop.xlane.xlu0 %1455
        %v1457 = vmul.f32 %v1411, %v762
        %v1458 = vmul.f32 %v1414, %v762
        %v1459 = vmul.f32 %v1417, %v762
        %v1460 = vmul.f32 %v1420, %v762
        %v1461 = vmul.f32 %v1423, %v762
        %v1462 = vmul.f32 %v1426, %v762
        %v1463 = vmul.f32 %v1429, %v762
        %v1464 = vmul.f32 %v1432, %v762
        %v1465 = vmul.f32 %v1435, %v762
        %v1466 = vmul.f32 %v1438, %v762
        %v1467 = vmul.f32 %v1441, %v762
        %v1468 = vmul.f32 %v1444, %v762
        %v1469 = vmul.f32 %v1447, %v762
        %v1470 = vmul.f32 %v1450, %v762
        %v1471 = vmul.f32 %v1453, %v762
        %v1472 = vmul.f32 %v1456, %v762
        %v1473 = vadd.f32 %v1457, 1e-12
        %v1474 = vadd.f32 %v1458, 1e-12
        %v1475 = vadd.f32 %v1459, 1e-12
        %v1476 = vadd.f32 %v1460, 1e-12
        %v1477 = vadd.f32 %v1461, 1e-12
        %v1478 = vadd.f32 %v1462, 1e-12
        %v1479 = vadd.f32 %v1463, 1e-12
        %v1480 = vadd.f32 %v1464, 1e-12
        %v1481 = vadd.f32 %v1465, 1e-12
        %v1482 = vadd.f32 %v1466, 1e-12
        %v1483 = vadd.f32 %v1467, 1e-12
        %v1484 = vadd.f32 %v1468, 1e-12
        %v1485 = vadd.f32 %v1469, 1e-12
        %v1486 = vadd.f32 %v1470, 1e-12
        %v1487 = vadd.f32 %v1471, 1e-12
        %v1488 = vadd.f32 %v1472, 1e-12
        %v1489 = vrsqrt.pop %v1473
        %v1490 = vrsqrt.pop %v1474
        %v1491 = vrsqrt.pop %v1475
        %v1492 = vrsqrt.pop %v1476
        %v1493 = vrsqrt.pop %v1477
        %v1494 = vrsqrt.pop %v1478
        %v1495 = vrsqrt.pop %v1479
        %v1496 = vrsqrt.pop %v1480
        %v1497 = vrsqrt.pop %v1481
        %v1498 = vrsqrt.pop %v1482
        %v1499 = vrsqrt.pop %v1483
        %v1500 = vrsqrt.pop %v1484
        %v1501 = vrsqrt.pop %v1485
        %v1502 = vrsqrt.pop %v1486
        %v1503 = vrsqrt.pop %v1487
        %v1504 = vrsqrt.pop %v1488
        %v1505 = vmul.f32 %v1377, %v1489
        %v1506 = vmul.f32 %v1378, %v1490
        %v1507 = vmul.f32 %v1379, %v1491
        %v1508 = vmul.f32 %v1380, %v1492
        %v1509 = vmul.f32 %v1381, %v1493
        %v1510 = vmul.f32 %v1382, %v1494
        %v1511 = vmul.f32 %v1383, %v1495
        %v1512 = vmul.f32 %v1384, %v1496
        %v1513 = vmul.f32 %v1385, %v1497
        %v1514 = vmul.f32 %v1386, %v1498
        %v1515 = vmul.f32 %v1387, %v1499
        %v1516 = vmul.f32 %v1388, %v1500
        %v1517 = vmul.f32 %v1389, %v1501
        %v1518 = vmul.f32 %v1390, %v1502
        %v1519 = vmul.f32 %v1391, %v1503
        %v1520 = vmul.f32 %v1392, %v1504
        %v1521 = vlaneseq
        %v1522 = vshrl.u32 %v1521, 7
        %v1523 = vsub.s32 6, %v1522
        %v1524 = vrot.slane %v289, %v1523
        %v1525 = vmul.f32 %v1524, %v1505
        %v1526 = vmul.f32 %v1524, %v1506
        %v1527 = vmul.f32 %v1524, %v1507
        %v1528 = vmul.f32 %v1524, %v1508
        %v1529 = vmul.f32 %v1524, %v1509
        %v1530 = vmul.f32 %v1524, %v1510
        %v1531 = vmul.f32 %v1524, %v1511
        %v1532 = vmul.f32 %v1524, %v1512
        %v1533 = vmul.f32 %v1524, %v1513
        %v1534 = vmul.f32 %v1524, %v1514
        %v1535 = vmul.f32 %v1524, %v1515
        %v1536 = vmul.f32 %v1524, %v1516
        %v1537 = vmul.f32 %v1524, %v1517
        %v1538 = vmul.f32 %v1524, %v1518
        %v1539 = vmul.f32 %v1524, %v1519
        %v1540 = vmul.f32 %v1524, %v1520
        %v1541 = vlaneseq
        %v1542 = vshrl.u32 %v1541, 7
        %v1543 = vsub.s32 7, %v1542
        %v1544 = vrot.slane %v289, %v1543
        %v1545 = vadd.f32 %v1525, %v1544
        %v1546 = vadd.f32 %v1526, %v1544
        %v1547 = vadd.f32 %v1527, %v1544
        %v1548 = vadd.f32 %v1528, %v1544
        %v1549 = vadd.f32 %v1529, %v1544
        %v1550 = vadd.f32 %v1530, %v1544
        %v1551 = vadd.f32 %v1531, %v1544
        %v1552 = vadd.f32 %v1532, %v1544
        %v1553 = vadd.f32 %v1533, %v1544
        %v1554 = vadd.f32 %v1534, %v1544
        %v1555 = vadd.f32 %v1535, %v1544
        %v1556 = vadd.f32 %v1536, %v1544
        %v1557 = vadd.f32 %v1537, %v1544
        %v1558 = vadd.f32 %v1538, %v1544
        %v1559 = vadd.f32 %v1539, %v1544
        %v1560 = vadd.f32 %v1540, %v1544
        %v1561 = vmax.f32 %v1545, 0.0
        %v1562 = vmax.f32 %v1546, 0.0
        %v1563 = vmax.f32 %v1547, 0.0
        %v1564 = vmax.f32 %v1548, 0.0
        %v1565 = vmax.f32 %v1549, 0.0
        %v1566 = vmax.f32 %v1550, 0.0
        %v1567 = vmax.f32 %v1551, 0.0
        %v1568 = vmax.f32 %v1552, 0.0
        %v1569 = vmax.f32 %v1553, 0.0
        %v1570 = vmax.f32 %v1554, 0.0
        %v1571 = vmax.f32 %v1555, 0.0
        %v1572 = vmax.f32 %v1556, 0.0
        %v1573 = vmax.f32 %v1557, 0.0
        %v1574 = vmax.f32 %v1558, 0.0
        %v1575 = vmax.f32 %v1559, 0.0
        %v1576 = vmax.f32 %v1560, 0.0
        %v1577 = vpack.c.bf16 %v1562, %v1561
        %v1578 = vpack.c.bf16 %v1564, %v1563
        %v1579 = vpack.c.bf16 %v1566, %v1565
        %v1580 = vpack.c.bf16 %v1568, %v1567
        %v1581 = vpack.c.bf16 %v1570, %v1569
        %v1582 = vpack.c.bf16 %v1572, %v1571
        %v1583 = vpack.c.bf16 %v1574, %v1573
        %v1584 = vpack.c.bf16 %v1576, %v1575
        %v1585 = vld [vmem:[#allocation5] sm:$0xf]
        %v1586 = vld [vmem:[#allocation5 + $0x4] sm:$0xf]
        %v1587 = vld [vmem:[#allocation5 + $0x8] sm:$0xf]
        %v1588 = vld [vmem:[#allocation5 + $0xc] sm:$0xf]
        %v1589 = vld [vmem:[#allocation5 + $0x10] sm:$0xf]
        %v1590 = vld [vmem:[#allocation5 + $0x14] sm:$0xf]
        %v1591 = vld [vmem:[#allocation5 + $0x18] sm:$0xf]
        %v1592 = vld [vmem:[#allocation5 + $0x1c] sm:$0xf]
        %v1593 = vlaneseq
        %v1594 = vshrl.u32 %v1593, 7
        %v1595 = vsub.s32 0, %v1594
        %v1596 = vrot.slane %v290, %v1595
        %v1605 = vunpack.c.l.b16 %v1585
        %v1606 = vunpack.c.l.b16 %v1586
        %v1607 = vunpack.c.l.b16 %v1587
        %v1608 = vunpack.c.l.b16 %v1588
        %v1609 = vunpack.c.l.b16 %v1589
        %v1610 = vunpack.c.l.b16 %v1590
        %v1611 = vunpack.c.l.b16 %v1591
        %v1612 = vunpack.c.l.b16 %v1592
        %v1613 = vpack.c.b16 %v1606, %v1605
        %v1614 = vpack.c.b16 %v1608, %v1607
        %v1615 = vpack.c.b16 %v1610, %v1609
        %v1616 = vpack.c.b16 %v1612, %v1611
        %v1622 = vsel %vm713, %v1577, 0
        %v1625 = vsel %vm713, %v1578, 0
        %v1628 = vsel %vm713, %v1579, 0
        %v1631 = vsel %vm713, %v1580, 0
        %v1634 = vsel %vm713, %v1581, 0
        %v1637 = vsel %vm713, %v1582, 0
        %v1640 = vsel %vm713, %v1583, 0
        %v1643 = vsel %vm713, %v1584, 0
        %1645 = vmatprep.subr.bf16.mxu0 0
        %1646 = vmatpush1.bf16.msra.mxu0 %v1613
        %1647 = vmatprep.subr.bf16.mxu0 0
        %1648 = vmatpush1.bf16.msra.mxu0 %v1614
        %1649 = vmatprep.subr.bf16.mxu0 0
        %1650 = vmatpush1.bf16.msra.mxu0 %v1615
        %1651 = vmatprep.subr.bf16.mxu0 0
        %1652 = vmatpush1.bf16.msra.mxu0 %v1616
        %1653 = vmatprep.subr.bf16.mxu0 0
        %1654 = vmatpush1.bf16.msra.mxu0 0
        %1655 = vmatprep.subr.bf16.mxu0 0
        %1656 = vmatpush1.bf16.msra.mxu0 0
        %1657 = vmatprep.subr.bf16.mxu0 0
        %1658 = vmatpush1.bf16.msra.mxu0 0
        %1659 = vmatprep.subr.bf16.mxu0 0
        %1660 = vmatpush1.bf16.msra.mxu0 0
        %1661 = vmatprep.subr.bf16.mxu0 0
        %1662 = vmatpush1.bf16.msra.mxu0 0
        %1663 = vmatprep.subr.bf16.mxu0 0
        %1664 = vmatpush1.bf16.msra.mxu0 0
        %1665 = vmatprep.subr.bf16.mxu0 0
        %1666 = vmatpush1.bf16.msra.mxu0 0
        %1667 = vmatprep.subr.bf16.mxu0 0
        %1668 = vmatpush1.bf16.msra.mxu0 0
        %1669 = vmatprep.subr.bf16.mxu0 0
        %1670 = vmatpush1.bf16.msra.mxu0 0
        %1671 = vmatprep.subr.bf16.mxu0 0
        %1672 = vmatpush1.bf16.msra.mxu0 0
        %1673 = vmatprep.subr.bf16.mxu0 0
        %1674 = vmatpush1.bf16.msra.mxu0 0
        %1675 = vmatprep.subr.bf16.mxu0 0
        %1676 = vmatpush1.bf16.msra.mxu0 0
        %1677 = vmatprep.mubr.bf16.mxu0 0
        %1678 = vmatmul.mubr.bf16.gmra.mrb[0].mxu0 %v1622
        %v1679 = vpop.f32.mrb[0].mxu0
        %v1680 = vadd.f32 %v1596, %v1679
        %v1681 = vpop.f32.mrb[0].mxu0
        %v1682 = vpop.f32.mrb[0].mxu0
        %v1683 = vadd.f32 %v1596, %v1682
        %v1684 = vpop.f32.mrb[0].mxu0
        %1685 = vmatprep.mubr.bf16.mxu0 0
        %1686 = vmatmul.mubr.bf16.gmra.mrb[0].mxu0 %v1625
        %v1687 = vpop.f32.mrb[0].mxu0
        %v1688 = vadd.f32 %v1596, %v1687
        %v1689 = vpop.f32.mrb[0].mxu0
        %v1690 = vpop.f32.mrb[0].mxu0
        %v1691 = vadd.f32 %v1596, %v1690
        %v1692 = vpop.f32.mrb[0].mxu0
        %1693 = vmatprep.mubr.bf16.mxu0 0
        %1694 = vmatmul.mubr.bf16.gmra.mrb[0].mxu0 %v1628
        %v1695 = vpop.f32.mrb[0].mxu0
        %v1696 = vadd.f32 %v1596, %v1695
        %v1697 = vpop.f32.mrb[0].mxu0
        %v1698 = vpop.f32.mrb[0].mxu0
        %v1699 = vadd.f32 %v1596, %v1698
        %v1700 = vpop.f32.mrb[0].mxu0
        %1701 = vmatprep.mubr.bf16.mxu0 0
        %1702 = vmatmul.mubr.bf16.gmra.mrb[0].mxu0 %v1631
        %v1703 = vpop.f32.mrb[0].mxu0
        %v1704 = vadd.f32 %v1596, %v1703
        %v1705 = vpop.f32.mrb[0].mxu0
        %v1706 = vpop.f32.mrb[0].mxu0
        %v1707 = vadd.f32 %v1596, %v1706
        %v1708 = vpop.f32.mrb[0].mxu0
        %1709 = vmatprep.mubr.bf16.mxu0 0
        %1710 = vmatmul.mubr.bf16.gmra.mrb[0].mxu0 %v1634
        %v1711 = vpop.f32.mrb[0].mxu0
        %v1712 = vadd.f32 %v1596, %v1711
        %v1713 = vpop.f32.mrb[0].mxu0
        %v1714 = vpop.f32.mrb[0].mxu0
        %v1715 = vadd.f32 %v1596, %v1714
        %v1716 = vpop.f32.mrb[0].mxu0
        %1717 = vmatprep.mubr.bf16.mxu0 0
        %1718 = vmatmul.mubr.bf16.gmra.mrb[0].mxu0 %v1637
        %v1719 = vpop.f32.mrb[0].mxu0
        %v1720 = vadd.f32 %v1596, %v1719
        %v1721 = vpop.f32.mrb[0].mxu0
        %v1722 = vpop.f32.mrb[0].mxu0
        %v1723 = vadd.f32 %v1596, %v1722
        %v1724 = vpop.f32.mrb[0].mxu0
        %1725 = vmatprep.mubr.bf16.mxu0 0
        %1726 = vmatmul.mubr.bf16.gmra.mrb[0].mxu0 %v1640
        %v1727 = vpop.f32.mrb[0].mxu0
        %v1728 = vadd.f32 %v1596, %v1727
        %v1729 = vpop.f32.mrb[0].mxu0
        %v1730 = vpop.f32.mrb[0].mxu0
        %v1731 = vadd.f32 %v1596, %v1730
        %v1732 = vpop.f32.mrb[0].mxu0
        %1733 = vmatprep.mubr.bf16.mxu0 0
        %1734 = vmatmul.mubr.bf16.gmra.mrb[0].mxu0 %v1643
        %v1735 = vpop.f32.mrb[0].mxu0
        %v1736 = vadd.f32 %v1596, %v1735
        %v1737 = vpop.f32.mrb[0].mxu0
        %v1738 = vpop.f32.mrb[0].mxu0
        %v1739 = vadd.f32 %v1596, %v1738
        %v1740 = vpop.f32.mrb[0].mxu0
        %1741 = vdwg.mxu0
        %v1742 = vadd.f32 %v291, %v1680
        %v1743 = vadd.f32 %v292, %v1683
        %v1744 = vadd.f32 %v293, %v1688
        %v1745 = vadd.f32 %v294, %v1691
        %v1746 = vadd.f32 %v295, %v1696
        %v1747 = vadd.f32 %v296, %v1699
        %v1748 = vadd.f32 %v297, %v1704
        %v1749 = vadd.f32 %v298, %v1707
        %v1750 = vadd.f32 %v299, %v1712
        %v1751 = vadd.f32 %v300, %v1715
        %v1752 = vadd.f32 %v301, %v1720
        %v1753 = vadd.f32 %v302, %v1723
        %v1754 = vadd.f32 %v303, %v1728
        %v1755 = vadd.f32 %v304, %v1731
        %v1756 = vadd.f32 %v305, %v1736
        %v1757 = vadd.f32 %v306, %v1739
        %1758 = vst [vmem:[%s285] sm:$0xff] %v1742
        %1759 = vst [vmem:[%s285 + $0x8] sm:$0xff] %v1743
        %1760 = vst [vmem:[%s285 + $0x10] sm:$0xff] %v1744
        %1761 = vst [vmem:[%s285 + $0x18] sm:$0xff] %v1745
        %1762 = vst [vmem:[%s285 + $0x20] sm:$0xff] %v1746
        %1763 = vst [vmem:[%s285 + $0x28] sm:$0xff] %v1747
        %1764 = vst [vmem:[%s285 + $0x30] sm:$0xff] %v1748
        %1765 = vst [vmem:[%s285 + $0x38] sm:$0xff] %v1749
        %1766 = vst [vmem:[%s285 + $0x40] sm:$0xff] %v1750
        %1767 = vst [vmem:[%s285 + $0x48] sm:$0xff] %v1751
        %1768 = vst [vmem:[%s285 + $0x50] sm:$0xff] %v1752
        %1769 = vst [vmem:[%s285 + $0x58] sm:$0xff] %v1753
        %1770 = vst [vmem:[%s285 + $0x60] sm:$0xff] %v1754
        %1771 = vst [vmem:[%s285 + $0x68] sm:$0xff] %v1755
        %1772 = vst [vmem:[%s285 + $0x70] sm:$0xff] %v1756
        %1773 = vst [vmem:[%s285 + $0x78] sm:$0xff] %v1757
        %s1774 = sand.u32 %s163, 1
        %s1775 = scalar_lea.sflag [#allocation4], %s1774
        %s1776 = sand.u32 %s163, 1
        %s1777 = smul.addr %s1776, 128
        %s1778 = scalar_lea.vmem [#allocation7], %s1777
        // Predicated region
        $region53: #{tpu_custom_call.1} parent=43 // pred_check
          %p1779 = pneg %p173
        $region54: #{tpu_custom_call.1} parent=43 // pred_check_branch
          %1781 = sbr.rel (%p1779) target = $region56
        $region55: #{tpu_custom_call.1} parent=43 // pred_region
          %s1782 = smul.u32 8, %s24
          %s1784 = ssub.s32 2048, 2048
          %1785 = vsyncadd %s1775, %s1784
          %s1786 = smul.addr %s1782, 2
          %s1787 = smul.addr %s1786, 128
          %s1788 = scalar_lea.hbm %s6, %s1787
          %s1789 = sshll.u32 %s1778, 4
          %s1790 = int_to_ptr.vmem [resolvable:$true] %s1789
          %1795 = dma.vmem_to_hbm [thread:$0]  %s1790, 2048, %s1788, %s1775, 128, 128, 8
        $region56: #{tpu_custom_call.1} parent=43 // pred_fallthru
          _
      $region44: #{tpu_custom_call.1} parent=5 // pred_fallthru
        _
      %p1796 = scmp.le.s32.totalorder 2, %s19
      // Predicated region
      $region57: #{tpu_custom_call.1} parent=5 // pred_check
        %p1797 = pneg %p1796
      $region58: #{tpu_custom_call.1} parent=5 // pred_check_branch
        %1799 = sbr.rel (%p1797) target = $region60
      $region59: #{tpu_custom_call.1} parent=5 // pred_region
        %s1800 = ssub.s32 %s19, 2
        // Predicated region
        $region61: #{tpu_custom_call.1} parent=59 // pred_check
          %p1801 = pneg %p179
        $region62: #{tpu_custom_call.1} parent=59 // pred_check_branch
          %1803 = sbr.rel (%p1801) target = $region64
        $region63: #{tpu_custom_call.1} parent=59 // pred_region
          %s1804 = sand.u32 %s164, 1
          %s1805 = scalar_lea.sflag [#allocation4], %s1804
          %s1806 = sand.u32 %s164, 1
          %s1807 = smul.addr %s1806, 128
          %s1808 = scalar_lea.vmem [#allocation7], %s1807
          %1809 = dma.done %s1805, 2048
        $region64: #{tpu_custom_call.1} parent=59 // pred_fallthru
          _
      $region60: #{tpu_custom_call.1} parent=5 // pred_fallthru
        _
    $region6: #{tpu_custom_call.1} parent=1 // loop_footer
      %s23 = sadd.s32 1, %s19
    $region7: #{tpu_custom_call.1} parent=1 // loop_footer_branch
      %18 = sbr.rel target = $region3
    $region8: #{tpu_custom_call.1} parent=1 // loop_exit
      _
    %1810 = vsyncpa [#allocation3], 1
    %s1811 = scalar_lea.sflag [#allocation3], 1
    %1812 = vsyncpa %s1811, 1
    %1813 = vsyncpa [#allocation6], 1
    %1814 = vsyncpa [#allocation4], 1
    %s1815 = scalar_lea.sflag [#allocation4], 1
    %1816 = vsyncpa %s1815, 1

</llo_original>
